<compile_context>
chip_gen: v7x
topology: tpu7x:2x2x1
jax: 0.10.0
libtpu: 0.0.40
codegen_flags: <defaults>
</compile_context>

<pallas_src>
import functools

import jax
import jax.numpy as jnp
from jax.experimental import pallas as pl
from jax.experimental.pallas import tpu as pltpu

_SUB_B = 256         # in-kernel batch sub-tile (keeps f32 temps in registers)
_MAX_BLOCK_B = 8192  # per-grid-step batch tile (amortizes ~0.35us/step overhead)


def _round_up(n: int, m: int) -> int:
    return ((n + m - 1) // m) * m


def mlp_kernel(x_ref, w1_ref, b1_ref, w2_ref, b2_ref,
               w3_ref, b3_ref, w4_ref, b4_ref, o_ref):
    """One batch tile of the 4-layer MLP.

    x_ref : (TB, in)  f32, native PyTorch activation layout (batch on sublanes).
    wN_ref: (in_features, out_features) f32 (pre-transposed in the wrapper).
    bN_ref: (1, out_features) f32.
    o_ref : (TB, out) f32, written directly in the module's output layout.
    """
    tb = x_ref.shape[0]
    n_sub = tb // _SUB_B           # static Python int

    # Tiny weights/biases: load once, stay resident for the whole tile.
    w1, b1 = w1_ref[...], b1_ref[...]
    w2, b2 = w2_ref[...], b2_ref[...]
    w3, b3 = w3_ref[...], b3_ref[...]
    w4, b4 = w4_ref[...], b4_ref[...]

    # Statically unrolled loop over 256-row batch sub-tiles: each layer's
    # (256, 64) f32 intermediate fits comfortably in the vreg file, so the
    # matmul -> bias -> ReLU chain never round-trips through VMEM.
    for j in range(n_sub):
        s = pl.ds(j * _SUB_B, _SUB_B)
        x = x_ref[s, :]
        h = jnp.maximum(jnp.dot(x, w1, preferred_element_type=jnp.float32) + b1, 0.0)
        h = jnp.maximum(jnp.dot(h, w2, preferred_element_type=jnp.float32) + b2, 0.0)
        h = jnp.maximum(jnp.dot(h, w3, preferred_element_type=jnp.float32) + b3, 0.0)
        o_ref[s, :] = jnp.dot(h, w4, preferred_element_type=jnp.float32) + b4


@functools.partial(jax.jit, static_argnames=("block_b",))
def nn_forward(x, params, *, block_b=None):
    """Forward pass.  x: (B, input_size) f32 -> (B, output_size) f32."""
    B, input_size = x.shape
    out_size = params["w4"].shape[0]
    d1, d2, d3 = (params["w1"].shape[0], params["w2"].shape[0], params["w3"].shape[0])

    if block_b is None:
        # Lane/MXU-friendly multiple of 256, capped so per-step VMEM stays small.
        block_b = min(_MAX_BLOCK_B, _round_up(max(B, 1), _SUB_B))
        # For large batches make sure there are >= 2 grid steps so
        # dimension_semantics=("parallel",) can use both v7x TensorCores
        # (harmless on single-core v5e/v6e).
        if B >= 4096 and pl.cdiv(B, block_b) < 2:
            block_b = _round_up(pl.cdiv(B, 2), _SUB_B)
    assert block_b % _SUB_B == 0

    n_blocks = pl.cdiv(B, block_b)
    b_pad = n_blocks * block_b

    x = x.astype(jnp.float32)
    if b_pad != B:
        # Only ragged batches pay for an extra copy of x; tile-aligned batches
        # go straight from their native HBM layout into the kernel.
        x = jnp.pad(x, ((0, b_pad - B), (0, 0)))

    # Tiny one-time transposes (<= 64x64): weights enter as (in, out) so every
    # layer is a canonical `x @ w`; activations and output keep the module's
    # native (B, features) layout end-to-end.
    w = [params[f"w{i}"].astype(jnp.float32).T for i in range(1, 5)]
    b = [params[f"b{i}"].astype(jnp.float32).reshape(1, -1) for i in range(1, 5)]

    const = lambda i: (0, 0)   # weights/biases: same block every step -> resident
    in_specs = [pl.BlockSpec((block_b, input_size), lambda i: (i, 0))]
    for wi, bi in zip(w, b):
        in_specs.append(pl.BlockSpec(wi.shape, const))
        in_specs.append(pl.BlockSpec(bi.shape, const))
    out_spec = pl.BlockSpec((block_b, out_size), lambda i: (i, 0))

    flops = 2 * b_pad * (input_size * d1 + d1 * d2 + d2 * d3 + d3 * out_size)
    bytes_accessed = (b_pad * input_size * 4 + b_pad * out_size * 4
                      + sum(a.size * 4 for a in w) + sum(a.size * 4 for a in b))

    out = pl.pallas_call(
        mlp_kernel,
        out_shape=jax.ShapeDtypeStruct((b_pad, out_size), jnp.float32),
        grid=(n_blocks,),
        in_specs=in_specs,
        out_specs=out_spec,
        compiler_params=pltpu.CompilerParams(
            dimension_semantics=("parallel",),
            vmem_limit_bytes=32 * 1024 * 1024),
        cost_estimate=pl.CostEstimate(
            flops=flops, transcendentals=0, bytes_accessed=bytes_accessed),
    )(x, w[0], b[0], w[1], b[1], w[2], b[2], w[3], b[3])

    return out[:B] if b_pad != B else out


def init_params(key, input_size, output_size):
    """PyTorch nn.Linear-style init: uniform(+-1/sqrt(fan_in)), native (out,in) layout."""
    dims = [(input_size, 64), (64, 64), (64, 32), (32, output_size)]
    params = {}
    for i, (fan_in, fan_out) in enumerate(dims, start=1):
        key, kw, kb = jax.random.split(key, 3)
        bound = 1.0 / jnp.sqrt(jnp.float32(fan_in))
        params[f"w{i}"] = jax.random.uniform(
            kw, (fan_out, fan_in), jnp.float32, minval=-bound, maxval=bound)
        params[f"b{i}"] = jax.random.uniform(
            kb, (fan_out,), jnp.float32, minval=-bound, maxval=bound)
    return params


def reference_forward(x, params):
    """Plain-JAX f32 reference (PyTorch-equivalent forward)."""
    h = x.astype(jnp.float32)
    for i in range(1, 5):
        h = jnp.dot(h, params[f"w{i}"].T,
                    precision=jax.lax.Precision.HIGHEST) + params[f"b{i}"]
        if i < 4:
            h = jnp.maximum(h, 0.0)
    return h


if __name__ == "__main__":
    input_size = 16   # tetris board feature vector
    output_size = 8   # number of actions

    key = jax.random.PRNGKey(0)
    key, kp = jax.random.split(key)
    params = init_params(kp, input_size, output_size)

    # Small inference-style batch (single 256-wide tile).
    key, kx = jax.random.split(key)
    x = jax.random.normal(kx, (2, input_size), jnp.float32)
    out = jax.block_until_ready(nn_forward(x, params))
    assert out.shape == (2, output_size)
    ref = reference_forward(x, params)
    assert jnp.allclose(out, ref, atol=2e-2, rtol=2e-2), "mismatch vs f32 reference (B=2)"

    # Mid-size, non-tile-aligned batch: pads to one 512-wide block (not 1024).
    key, kx2 = jax.random.split(key)
    x2 = jax.random.normal(kx2, (300, input_size), jnp.float32)
    out2 = jax.block_until_ready(nn_forward(x2, params))
    assert out2.shape == (300, output_size)
    ref2 = reference_forward(x2, params)
    assert jnp.allclose(out2, ref2, atol=2e-2, rtol=2e-2), "mismatch vs f32 reference (B=300)"

    # Larger batch: exercises the multi-block ("parallel") grid and the
    # in-kernel sub-tiled loop (2 blocks of 2560 rows, 10 sub-tiles each).
    key, kx3 = jax.random.split(key)
    x3 = jax.random.normal(kx3, (5000, input_size), jnp.float32)
    out3 = jax.block_until_ready(nn_forward(x3, params))
    assert out3.shape == (5000, output_size)
    ref3 = reference_forward(x3, params)
    assert jnp.allclose(out3, ref3, atol=2e-2, rtol=2e-2), "mismatch vs f32 reference (B=5000)"

    print("KERNEL_OK")
</pallas_src>

<mosaic_0001>
module attributes {stable_mosaic.version = 11 : i64} {
  func.func @mlp_kernel(%arg0: i32, %arg1: memref<256x16xf32, #tpu.memory_space<vmem>>, %arg2: memref<16x64xf32, #tpu.memory_space<vmem>>, %arg3: memref<1x64xf32, #tpu.memory_space<vmem>>, %arg4: memref<64x64xf32, #tpu.memory_space<vmem>>, %arg5: memref<1x64xf32, #tpu.memory_space<vmem>>, %arg6: memref<64x32xf32, #tpu.memory_space<vmem>>, %arg7: memref<1x32xf32, #tpu.memory_space<vmem>>, %arg8: memref<32x8xf32, #tpu.memory_space<vmem>>, %arg9: memref<1x8xf32, #tpu.memory_space<vmem>>, %arg10: memref<256x8xf32, #tpu.memory_space<vmem>>) attributes {dimension_semantics = [#tpu.dimension_semantics<parallel>], iteration_bounds = array<i64: 1>, scalar_prefetch = 0 : i64, scratch_operands = 0 : i64, tpu.core_type = #tpu.core_type<tc>, window_params = [{transform_indices = @transform_0, window_bounds = array<i64: 256, 16>}, {pipeline_mode = #tpu.pipeline_mode<synchronous>, transform_indices = @transform_1, window_bounds = array<i64: 16, 64>}, {pipeline_mode = #tpu.pipeline_mode<synchronous>, transform_indices = @transform_2, window_bounds = array<i64: 1, 64>}, {pipeline_mode = #tpu.pipeline_mode<synchronous>, transform_indices = @transform_3, window_bounds = array<i64: 64, 64>}, {pipeline_mode = #tpu.pipeline_mode<synchronous>, transform_indices = @transform_4, window_bounds = array<i64: 1, 64>}, {pipeline_mode = #tpu.pipeline_mode<synchronous>, transform_indices = @transform_5, window_bounds = array<i64: 64, 32>}, {pipeline_mode = #tpu.pipeline_mode<synchronous>, transform_indices = @transform_6, window_bounds = array<i64: 1, 32>}, {pipeline_mode = #tpu.pipeline_mode<synchronous>, transform_indices = @transform_7, window_bounds = array<i64: 32, 8>}, {pipeline_mode = #tpu.pipeline_mode<synchronous>, transform_indices = @transform_8, window_bounds = array<i64: 1, 8>}, {transform_indices = @transform_9, window_bounds = array<i64: 256, 8>}]} {
    %c0 = arith.constant 0 : index
    %c0_0 = arith.constant 0 : index
    %0 = vector.load %arg2[%c0, %c0_0] : memref<16x64xf32, #tpu.memory_space<vmem>>, vector<16x64xf32>
    %c0_1 = arith.constant 0 : index
    %c0_2 = arith.constant 0 : index
    %1 = vector.load %arg3[%c0_1, %c0_2] : memref<1x64xf32, #tpu.memory_space<vmem>>, vector<1x64xf32>
    %c0_3 = arith.constant 0 : index
    %c0_4 = arith.constant 0 : index
    %2 = vector.load %arg4[%c0_3, %c0_4] : memref<64x64xf32, #tpu.memory_space<vmem>>, vector<64x64xf32>
    %c0_5 = arith.constant 0 : index
    %c0_6 = arith.constant 0 : index
    %3 = vector.load %arg5[%c0_5, %c0_6] : memref<1x64xf32, #tpu.memory_space<vmem>>, vector<1x64xf32>
    %c0_7 = arith.constant 0 : index
    %c0_8 = arith.constant 0 : index
    %4 = vector.load %arg6[%c0_7, %c0_8] : memref<64x32xf32, #tpu.memory_space<vmem>>, vector<64x32xf32>
    %c0_9 = arith.constant 0 : index
    %c0_10 = arith.constant 0 : index
    %5 = vector.load %arg7[%c0_9, %c0_10] : memref<1x32xf32, #tpu.memory_space<vmem>>, vector<1x32xf32>
    %c0_11 = arith.constant 0 : index
    %c0_12 = arith.constant 0 : index
    %6 = vector.load %arg8[%c0_11, %c0_12] : memref<32x8xf32, #tpu.memory_space<vmem>>, vector<32x8xf32>
    %c0_13 = arith.constant 0 : index
    %c0_14 = arith.constant 0 : index
    %7 = vector.load %arg9[%c0_13, %c0_14] : memref<1x8xf32, #tpu.memory_space<vmem>>, vector<1x8xf32>
    %c0_15 = arith.constant 0 : index
    %c0_16 = arith.constant 0 : index
    %8 = vector.load %arg1[%c0_15, %c0_16] : memref<256x16xf32, #tpu.memory_space<vmem>>, vector<256x16xf32>
    %cst = arith.constant dense<0.000000e+00> : vector<256x64xf32>
    %9 = tpu.matmul %8, %0, %cst {dimension_numbers = #tpu.dot_dimension_numbers<[1], [0], [0], [1], [0, 0, 1, 1], [], []>} : vector<256x16xf32>, vector<16x64xf32>, vector<256x64xf32> -> vector<256x64xf32>
    %10 = vector.broadcast %1 : vector<1x64xf32> to vector<256x64xf32>
    %11 = arith.addf %9, %10 : vector<256x64xf32>
    %cst_17 = arith.constant 0.000000e+00 : f32
    %12 = vector.broadcast %cst_17 : f32 to vector<256x64xf32>
    %13 = arith.maximumf %11, %12 : vector<256x64xf32>
    %cst_18 = arith.constant dense<0.000000e+00> : vector<256x64xf32>
    %14 = tpu.matmul %13, %2, %cst_18 {dimension_numbers = #tpu.dot_dimension_numbers<[1], [0], [0], [1], [0, 0, 1, 1], [], []>} : vector<256x64xf32>, vector<64x64xf32>, vector<256x64xf32> -> vector<256x64xf32>
    %15 = vector.broadcast %3 : vector<1x64xf32> to vector<256x64xf32>
    %16 = arith.addf %14, %15 : vector<256x64xf32>
    %cst_19 = arith.constant 0.000000e+00 : f32
    %17 = vector.broadcast %cst_19 : f32 to vector<256x64xf32>
    %18 = arith.maximumf %16, %17 : vector<256x64xf32>
    %cst_20 = arith.constant dense<0.000000e+00> : vector<256x32xf32>
    %19 = tpu.matmul %18, %4, %cst_20 {dimension_numbers = #tpu.dot_dimension_numbers<[1], [0], [0], [1], [0, 0, 1, 1], [], []>} : vector<256x64xf32>, vector<64x32xf32>, vector<256x32xf32> -> vector<256x32xf32>
    %20 = vector.broadcast %5 : vector<1x32xf32> to vector<256x32xf32>
    %21 = arith.addf %19, %20 : vector<256x32xf32>
    %cst_21 = arith.constant 0.000000e+00 : f32
    %22 = vector.broadcast %cst_21 : f32 to vector<256x32xf32>
    %23 = arith.maximumf %21, %22 : vector<256x32xf32>
    %cst_22 = arith.constant dense<0.000000e+00> : vector<256x8xf32>
    %24 = tpu.matmul %23, %6, %cst_22 {dimension_numbers = #tpu.dot_dimension_numbers<[1], [0], [0], [1], [0, 0, 1, 1], [], []>} : vector<256x32xf32>, vector<32x8xf32>, vector<256x8xf32> -> vector<256x8xf32>
    %25 = vector.broadcast %7 : vector<1x8xf32> to vector<256x8xf32>
    %26 = arith.addf %24, %25 : vector<256x8xf32>
    %c0_23 = arith.constant 0 : index
    %c0_24 = arith.constant 0 : index
    %27 = vector.load %arg10[%c0_23, %c0_24] : memref<256x8xf32, #tpu.memory_space<vmem>>, vector<256x8xf32>
    tpu.vector_store %arg10[%c0_23, %c0_24], %26 {strides = array<i32>} : memref<256x8xf32, #tpu.memory_space<vmem>>, vector<256x8xf32>,
    return
  }
  func.func @transform_0(%arg0: i32) -> (i32, i32) {
    %c0_i32 = arith.constant 0 : i32
    %c0_i32_0 = arith.constant 0 : i32
    return %arg0, %c0_i32 : i32, i32
  }
  func.func @transform_1(%arg0: i32) -> (i32, i32) {
    %c0_i32 = arith.constant 0 : i32
    %c0_i32_0 = arith.constant 0 : i32
    %c0_i32_1 = arith.constant 0 : i32
    return %c0_i32, %c0_i32_0 : i32, i32
  }
  func.func @transform_2(%arg0: i32) -> (i32, i32) {
    %c0_i32 = arith.constant 0 : i32
    %c0_i32_0 = arith.constant 0 : i32
    %c0_i32_1 = arith.constant 0 : i32
    return %c0_i32, %c0_i32_0 : i32, i32
  }
  func.func @transform_3(%arg0: i32) -> (i32, i32) {
    %c0_i32 = arith.constant 0 : i32
    %c0_i32_0 = arith.constant 0 : i32
    %c0_i32_1 = arith.constant 0 : i32
    return %c0_i32, %c0_i32_0 : i32, i32
  }
  func.func @transform_4(%arg0: i32) -> (i32, i32) {
    %c0_i32 = arith.constant 0 : i32
    %c0_i32_0 = arith.constant 0 : i32
    %c0_i32_1 = arith.constant 0 : i32
    return %c0_i32, %c0_i32_0 : i32, i32
  }
  func.func @transform_5(%arg0: i32) -> (i32, i32) {
    %c0_i32 = arith.constant 0 : i32
    %c0_i32_0 = arith.constant 0 : i32
    %c0_i32_1 = arith.constant 0 : i32
    return %c0_i32, %c0_i32_0 : i32, i32
  }
  func.func @transform_6(%arg0: i32) -> (i32, i32) {
    %c0_i32 = arith.constant 0 : i32
    %c0_i32_0 = arith.constant 0 : i32
    %c0_i32_1 = arith.constant 0 : i32
    return %c0_i32, %c0_i32_0 : i32, i32
  }
  func.func @transform_7(%arg0: i32) -> (i32, i32) {
    %c0_i32 = arith.constant 0 : i32
    %c0_i32_0 = arith.constant 0 : i32
    %c0_i32_1 = arith.constant 0 : i32
    return %c0_i32, %c0_i32_0 : i32, i32
  }
  func.func @transform_8(%arg0: i32) -> (i32, i32) {
    %c0_i32 = arith.constant 0 : i32
    %c0_i32_0 = arith.constant 0 : i32
    %c0_i32_1 = arith.constant 0 : i32
    return %c0_i32, %c0_i32_0 : i32, i32
  }
  func.func @transform_9(%arg0: i32) -> (i32, i32) {
    %c0_i32 = arith.constant 0 : i32
    %c0_i32_0 = arith.constant 0 : i32
    return %arg0, %c0_i32 : i32, i32
  }
}

</mosaic_0001>

<llo_original>
// kernel: nn_forward.1
$region0: #{nn_forward.1}
  #allocation0 [shape = 'u32[]', space=smem, size = 0x4, offset = 0x4, fixed_abs, tag = 'smem constant byte address 0x4 - core index']
  #allocation1 [shape = 'u32[144,128]{1,0:T(1,128)}', space=vmem, size = 0x12000, scoped, tag = 'internal scratch']
  %s0 = inlined_call_operand.vmem [shape: f32[256,16], index: 0, kind: input, shape index: {}]
  %s1 = inlined_call_operand.vmem [shape: f32[16,64], index: 1, kind: input, shape index: {}]
  %s2 = inlined_call_operand.vmem [shape: f32[1,64], index: 2, kind: input, shape index: {}]
  %s3 = inlined_call_operand.vmem [shape: f32[64,64], index: 3, kind: input, shape index: {}]
  %s4 = inlined_call_operand.vmem [shape: f32[1,64], index: 4, kind: input, shape index: {}]
  %s5 = inlined_call_operand.vmem [shape: f32[64,32], index: 5, kind: input, shape index: {}]
  %s6 = inlined_call_operand.vmem [shape: f32[1,32], index: 6, kind: input, shape index: {}]
  %s7 = inlined_call_operand.vmem [shape: f32[32,8], index: 7, kind: input, shape index: {}]
  %s8 = inlined_call_operand.vmem [shape: f32[1,8], index: 8, kind: input, shape index: {}]
  %s9 = inlined_call_operand.vmem [shape: f32[256,8], index: 9, kind: output, shape index: {}]
  %s10 = sld [smem:[#allocation0]]
  $region46: #{nn_forward.1} parent=0
    _
  %s12 = ssub.s32 1, %s10
  %s13 = scalar_select 0, %s12, %s10
  // Predicated region
  $region2: #{nn_forward.1} parent=0 // pred_check
    _
  $region3: #{nn_forward.1} parent=0 // pred_check_branch
    %15 = sbr.rel (0) target = $region5
  $region4: #{nn_forward.1} parent=0 // pred_region
    _
  $region5: #{nn_forward.1} parent=0 // pred_fallthru
    _
  // Predicated region
  $region6: #{nn_forward.1} parent=0 // pred_check
    _
  $region7: #{nn_forward.1} parent=0 // pred_check_branch
    %17 = sbr.rel (0) target = $region9
  $region8: #{nn_forward.1} parent=0 // pred_region
    _
  $region9: #{nn_forward.1} parent=0 // pred_fallthru
    _
  // Predicated region
  $region10: #{nn_forward.1} parent=0 // pred_check
    _
  $region11: #{nn_forward.1} parent=0 // pred_check_branch
    %19 = sbr.rel (0) target = $region13
  $region12: #{nn_forward.1} parent=0 // pred_region
    _
  $region13: #{nn_forward.1} parent=0 // pred_fallthru
    _
  // Predicated region
  $region14: #{nn_forward.1} parent=0 // pred_check
    _
  $region15: #{nn_forward.1} parent=0 // pred_check_branch
    %21 = sbr.rel (0) target = $region17
  $region16: #{nn_forward.1} parent=0 // pred_region
    _
  $region17: #{nn_forward.1} parent=0 // pred_fallthru
    _
  // Predicated region
  $region18: #{nn_forward.1} parent=0 // pred_check
    _
  $region19: #{nn_forward.1} parent=0 // pred_check_branch
    %23 = sbr.rel (0) target = $region21
  $region20: #{nn_forward.1} parent=0 // pred_region
    _
  $region21: #{nn_forward.1} parent=0 // pred_fallthru
    _
  // Predicated region
  $region22: #{nn_forward.1} parent=0 // pred_check
    _
  $region23: #{nn_forward.1} parent=0 // pred_check_branch
    %25 = sbr.rel (0) target = $region25
  $region24: #{nn_forward.1} parent=0 // pred_region
    _
  $region25: #{nn_forward.1} parent=0 // pred_fallthru
    _
  // Predicated region
  $region26: #{nn_forward.1} parent=0 // pred_check
    _
  $region27: #{nn_forward.1} parent=0 // pred_check_branch
    %27 = sbr.rel (0) target = $region29
  $region28: #{nn_forward.1} parent=0 // pred_region
    _
  $region29: #{nn_forward.1} parent=0 // pred_fallthru
    _
  // Predicated region
  $region30: #{nn_forward.1} parent=0 // pred_check
    _
  $region31: #{nn_forward.1} parent=0 // pred_check_branch
    %29 = sbr.rel (0) target = $region33
  $region32: #{nn_forward.1} parent=0 // pred_region
    _
  $region33: #{nn_forward.1} parent=0 // pred_fallthru
    _
  // Predicated region
  $region34: #{nn_forward.1} parent=0 // pred_check
    _
  $region35: #{nn_forward.1} parent=0 // pred_check_branch
    %31 = sbr.rel (0) target = $region37
  $region36: #{nn_forward.1} parent=0 // pred_region
    _
  $region37: #{nn_forward.1} parent=0 // pred_fallthru
    _
  %v32 = vld [vmem:[%s1] sm:$0xff]
  %v33 = vld [vmem:[%s1 + $0x8] sm:$0xff]
  %v34 = vld [vmem:[%s2] sm:$0x1]
  %v35 = vld [vmem:[%s3] sm:$0xff]
  %v36 = vld [vmem:[%s3 + $0x8] sm:$0xff]
  %v37 = vld [vmem:[%s3 + $0x10] sm:$0xff]
  %v38 = vld [vmem:[%s3 + $0x18] sm:$0xff]
  %v39 = vld [vmem:[%s3 + $0x20] sm:$0xff]
  %v40 = vld [vmem:[%s3 + $0x28] sm:$0xff]
  %v41 = vld [vmem:[%s3 + $0x30] sm:$0xff]
  %v42 = vld [vmem:[%s3 + $0x38] sm:$0xff]
  %v43 = vld [vmem:[%s4] sm:$0x1]
  %v44 = vld [vmem:[%s5] sm:$0xff]
  %v45 = vld [vmem:[%s5 + $0x8] sm:$0xff]
  %v46 = vld [vmem:[%s5 + $0x10] sm:$0xff]
  %v47 = vld [vmem:[%s5 + $0x18] sm:$0xff]
  %v48 = vld [vmem:[%s5 + $0x20] sm:$0xff]
  %v49 = vld [vmem:[%s5 + $0x28] sm:$0xff]
  %v50 = vld [vmem:[%s5 + $0x30] sm:$0xff]
  %v51 = vld [vmem:[%s5 + $0x38] sm:$0xff]
  %v52 = vld [vmem:[%s6] sm:$0x1]
  %v53 = vld [vmem:[%s7] sm:$0xff]
  %v54 = vld [vmem:[%s7 + $0x8] sm:$0xff]
  %v55 = vld [vmem:[%s7 + $0x10] sm:$0xff]
  %v56 = vld [vmem:[%s7 + $0x18] sm:$0xff]
  %v57 = vld [vmem:[%s8] sm:$0x1]
  %v58 = vld [vmem:[%s0] sm:$0xff]
  %v59 = vld [vmem:[%s0 + $0x8] sm:$0xff]
  %v60 = vld [vmem:[%s0 + $0x10] sm:$0xff]
  %v61 = vld [vmem:[%s0 + $0x18] sm:$0xff]
  %v62 = vld [vmem:[%s0 + $0x20] sm:$0xff]
  %v63 = vld [vmem:[%s0 + $0x28] sm:$0xff]
  %v64 = vld [vmem:[%s0 + $0x30] sm:$0xff]
  %v65 = vld [vmem:[%s0 + $0x38] sm:$0xff]
  %v66 = vld [vmem:[%s0 + $0x40] sm:$0xff]
  %v67 = vld [vmem:[%s0 + $0x48] sm:$0xff]
  %v68 = vld [vmem:[%s0 + $0x50] sm:$0xff]
  %v69 = vld [vmem:[%s0 + $0x58] sm:$0xff]
  %v70 = vld [vmem:[%s0 + $0x60] sm:$0xff]
  %v71 = vld [vmem:[%s0 + $0x68] sm:$0xff]
  %v72 = vld [vmem:[%s0 + $0x70] sm:$0xff]
  %v73 = vld [vmem:[%s0 + $0x78] sm:$0xff]
  %v74 = vld [vmem:[%s0 + $0x80] sm:$0xff]
  %v75 = vld [vmem:[%s0 + $0x88] sm:$0xff]
  %v76 = vld [vmem:[%s0 + $0x90] sm:$0xff]
  %v77 = vld [vmem:[%s0 + $0x98] sm:$0xff]
  %v78 = vld [vmem:[%s0 + $0xa0] sm:$0xff]
  %v79 = vld [vmem:[%s0 + $0xa8] sm:$0xff]
  %v80 = vld [vmem:[%s0 + $0xb0] sm:$0xff]
  %v81 = vld [vmem:[%s0 + $0xb8] sm:$0xff]
  %v82 = vld [vmem:[%s0 + $0xc0] sm:$0xff]
  %v83 = vld [vmem:[%s0 + $0xc8] sm:$0xff]
  %v84 = vld [vmem:[%s0 + $0xd0] sm:$0xff]
  %v85 = vld [vmem:[%s0 + $0xd8] sm:$0xff]
  %v86 = vld [vmem:[%s0 + $0xe0] sm:$0xff]
  %v87 = vld [vmem:[%s0 + $0xe8] sm:$0xff]
  %v88 = vld [vmem:[%s0 + $0xf0] sm:$0xff]
  %v89 = vld [vmem:[%s0 + $0xf8] sm:$0xff]
  %v91 = vlaneseq
  %v92 = vshrl.u32 %v91, 7
  %v93 = vsub.s32 0, %v92
  %v94 = vrot.slane %v34, %v93
  %vm96 = vcmask 130048
  %v98 = vsel %vm96, %v58, 0
  %v101 = vsel %vm96, %v59, 0
  %v104 = vsel %vm96, %v60, 0
  %v107 = vsel %vm96, %v61, 0
  %v110 = vsel %vm96, %v62, 0
  %v113 = vsel %vm96, %v63, 0
  %v116 = vsel %vm96, %v64, 0
  %v119 = vsel %vm96, %v65, 0
  %v122 = vsel %vm96, %v66, 0
  %v125 = vsel %vm96, %v67, 0
  %v128 = vsel %vm96, %v68, 0
  %v131 = vsel %vm96, %v69, 0
  %v134 = vsel %vm96, %v70, 0
  %v137 = vsel %vm96, %v71, 0
  %v140 = vsel %vm96, %v72, 0
  %v143 = vsel %vm96, %v73, 0
  %v146 = vsel %vm96, %v74, 0
  %v149 = vsel %vm96, %v75, 0
  %v152 = vsel %vm96, %v76, 0
  %v155 = vsel %vm96, %v77, 0
  %v158 = vsel %vm96, %v78, 0
  %v161 = vsel %vm96, %v79, 0
  %v164 = vsel %vm96, %v80, 0
  %v167 = vsel %vm96, %v81, 0
  %v170 = vsel %vm96, %v82, 0
  %v173 = vsel %vm96, %v83, 0
  %v176 = vsel %vm96, %v84, 0
  %v179 = vsel %vm96, %v85, 0
  %v182 = vsel %vm96, %v86, 0
  %v185 = vsel %vm96, %v87, 0
  %v188 = vsel %vm96, %v88, 0
  %v191 = vsel %vm96, %v89, 0
  %193 = vmatprep.subr.mxu0 0.0
  %194 = vmatpush1.msra.mxu0 %v32
  %195 = vmatprep.subr.mxu0 0.0
  %196 = vmatpush1.msra.mxu0 %v33
  %197 = vmatprep.subr.mxu0 0.0
  %198 = vmatpush1.msra.mxu0 0.0
  %199 = vmatprep.subr.mxu0 0.0
  %200 = vmatpush1.msra.mxu0 0.0
  %201 = vmatprep.subr.mxu0 0.0
  %202 = vmatpush1.msra.mxu0 0.0
  %203 = vmatprep.subr.mxu0 0.0
  %204 = vmatpush1.msra.mxu0 0.0
  %205 = vmatprep.subr.mxu0 0.0
  %206 = vmatpush1.msra.mxu0 0.0
  %207 = vmatprep.subr.mxu0 0.0
  %208 = vmatpush1.msra.mxu0 0.0
  %209 = vmatprep.subr.mxu0 0.0
  %210 = vmatpush1.msra.mxu0 0.0
  %211 = vmatprep.subr.mxu0 0.0
  %212 = vmatpush1.msra.mxu0 0.0
  %213 = vmatprep.subr.mxu0 0.0
  %214 = vmatpush1.msra.mxu0 0.0
  %215 = vmatprep.subr.mxu0 0.0
  %216 = vmatpush1.msra.mxu0 0.0
  %217 = vmatprep.subr.mxu0 0.0
  %218 = vmatpush1.msra.mxu0 0.0
  %219 = vmatprep.subr.mxu0 0.0
  %220 = vmatpush1.msra.mxu0 0.0
  %221 = vmatprep.subr.mxu0 0.0
  %222 = vmatpush1.msra.mxu0 0.0
  %223 = vmatprep.subr.mxu0 0.0
  %224 = vmatpush1.msra.mxu0 0.0
  %225 = vmatprep.subr.mxu0 0.0
  %226 = vmatpush1.msra.mxu0 0.0
  %227 = vmatprep.subr.mxu0 0.0
  %228 = vmatpush1.msra.mxu0 0.0
  %229 = vmatprep.subr.mxu0 0.0
  %230 = vmatpush1.msra.mxu0 0.0
  %231 = vmatprep.subr.mxu0 0.0
  %232 = vmatpush1.msra.mxu0 0.0
  %233 = vmatprep.subr.mxu0 0.0
  %234 = vmatpush1.msra.mxu0 0.0
  %235 = vmatprep.subr.mxu0 0.0
  %236 = vmatpush1.msra.mxu0 0.0
  %237 = vmatprep.subr.mxu0 0.0
  %238 = vmatpush1.msra.mxu0 0.0
  %239 = vmatprep.subr.mxu0 0.0
  %240 = vmatpush1.msra.mxu0 0.0
  %241 = vmatprep.subr.mxu0 0.0
  %242 = vmatpush1.msra.mxu0 0.0
  %243 = vmatprep.subr.mxu0 0.0
  %244 = vmatpush1.msra.mxu0 0.0
  %245 = vmatprep.subr.mxu0 0.0
  %246 = vmatpush1.msra.mxu0 0.0
  %247 = vmatprep.subr.mxu0 0.0
  %248 = vmatpush1.msra.mxu0 0.0
  %249 = vmatprep.subr.mxu0 0.0
  %250 = vmatpush1.msra.mxu0 0.0
  %251 = vmatprep.subr.mxu0 0.0
  %252 = vmatpush1.msra.mxu0 0.0
  %253 = vmatprep.subr.mxu0 0.0
  %254 = vmatpush1.msra.mxu0 0.0
  %255 = vmatprep.subr.mxu0 0.0
  %256 = vmatpush1.msra.mxu0 0.0
  %257 = vmatprep.mubr.f32.mxu0 0.0
  %258 = vmatmul.mubr.f32.gmra.mrb[0].mxu0 %v98
  %v259 = vpop.f32.mrb[0].mxu0
  %v260 = vadd.f32 %v94, %v259
  %v261 = vpop.f32.mrb[0].mxu0
  %262 = vmatprep.mubr.f32.mxu0 0.0
  %263 = vmatmul.mubr.f32.gmra.mrb[0].mxu0 %v101
  %v264 = vpop.f32.mrb[0].mxu0
  %v265 = vadd.f32 %v94, %v264
  %v266 = vpop.f32.mrb[0].mxu0
  %267 = vmatprep.mubr.f32.mxu0 0.0
  %268 = vmatmul.mubr.f32.gmra.mrb[0].mxu0 %v104
  %v269 = vpop.f32.mrb[0].mxu0
  %v270 = vadd.f32 %v94, %v269
  %v271 = vpop.f32.mrb[0].mxu0
  %272 = vmatprep.mubr.f32.mxu0 0.0
  %273 = vmatmul.mubr.f32.gmra.mrb[0].mxu0 %v107
  %v274 = vpop.f32.mrb[0].mxu0
  %v275 = vadd.f32 %v94, %v274
  %v276 = vpop.f32.mrb[0].mxu0
  %277 = vmatprep.mubr.f32.mxu0 0.0
  %278 = vmatmul.mubr.f32.gmra.mrb[0].mxu0 %v110
  %v279 = vpop.f32.mrb[0].mxu0
  %v280 = vadd.f32 %v94, %v279
  %v281 = vpop.f32.mrb[0].mxu0
  %282 = vmatprep.mubr.f32.mxu0 0.0
  %283 = vmatmul.mubr.f32.gmra.mrb[0].mxu0 %v113
  %v284 = vpop.f32.mrb[0].mxu0
  %v285 = vadd.f32 %v94, %v284
  %v286 = vpop.f32.mrb[0].mxu0
  %287 = vmatprep.mubr.f32.mxu0 0.0
  %288 = vmatmul.mubr.f32.gmra.mrb[0].mxu0 %v116
  %v289 = vpop.f32.mrb[0].mxu0
  %v290 = vadd.f32 %v94, %v289
  %v291 = vpop.f32.mrb[0].mxu0
  %292 = vmatprep.mubr.f32.mxu0 0.0
  %293 = vmatmul.mubr.f32.gmra.mrb[0].mxu0 %v119
  %v294 = vpop.f32.mrb[0].mxu0
  %v295 = vadd.f32 %v94, %v294
  %v296 = vpop.f32.mrb[0].mxu0
  %297 = vmatprep.mubr.f32.mxu0 0.0
  %298 = vmatmul.mubr.f32.gmra.mrb[0].mxu0 %v122
  %v299 = vpop.f32.mrb[0].mxu0
  %v300 = vadd.f32 %v94, %v299
  %v301 = vpop.f32.mrb[0].mxu0
  %302 = vmatprep.mubr.f32.mxu0 0.0
  %303 = vmatmul.mubr.f32.gmra.mrb[0].mxu0 %v125
  %v304 = vpop.f32.mrb[0].mxu0
  %v305 = vadd.f32 %v94, %v304
  %v306 = vpop.f32.mrb[0].mxu0
  %307 = vmatprep.mubr.f32.mxu0 0.0
  %308 = vmatmul.mubr.f32.gmra.mrb[0].mxu0 %v128
  %v309 = vpop.f32.mrb[0].mxu0
  %v310 = vadd.f32 %v94, %v309
  %v311 = vpop.f32.mrb[0].mxu0
  %312 = vmatprep.mubr.f32.mxu0 0.0
  %313 = vmatmul.mubr.f32.gmra.mrb[0].mxu0 %v131
  %v314 = vpop.f32.mrb[0].mxu0
  %v315 = vadd.f32 %v94, %v314
  %v316 = vpop.f32.mrb[0].mxu0
  %317 = vmatprep.mubr.f32.mxu0 0.0
  %318 = vmatmul.mubr.f32.gmra.mrb[0].mxu0 %v134
  %v319 = vpop.f32.mrb[0].mxu0
  %v320 = vadd.f32 %v94, %v319
  %v321 = vpop.f32.mrb[0].mxu0
  %322 = vmatprep.mubr.f32.mxu0 0.0
  %323 = vmatmul.mubr.f32.gmra.mrb[0].mxu0 %v137
  %v324 = vpop.f32.mrb[0].mxu0
  %v325 = vadd.f32 %v94, %v324
  %v326 = vpop.f32.mrb[0].mxu0
  %327 = vmatprep.mubr.f32.mxu0 0.0
  %328 = vmatmul.mubr.f32.gmra.mrb[0].mxu0 %v140
  %v329 = vpop.f32.mrb[0].mxu0
  %v330 = vadd.f32 %v94, %v329
  %v331 = vpop.f32.mrb[0].mxu0
  %332 = vmatprep.mubr.f32.mxu0 0.0
  %333 = vmatmul.mubr.f32.gmra.mrb[0].mxu0 %v143
  %v334 = vpop.f32.mrb[0].mxu0
  %v335 = vadd.f32 %v94, %v334
  %v336 = vpop.f32.mrb[0].mxu0
  %337 = vmatprep.mubr.f32.mxu0 0.0
  %338 = vmatmul.mubr.f32.gmra.mrb[0].mxu0 %v146
  %v339 = vpop.f32.mrb[0].mxu0
  %v340 = vadd.f32 %v94, %v339
  %v341 = vpop.f32.mrb[0].mxu0
  %342 = vmatprep.mubr.f32.mxu0 0.0
  %343 = vmatmul.mubr.f32.gmra.mrb[0].mxu0 %v149
  %v344 = vpop.f32.mrb[0].mxu0
  %v345 = vadd.f32 %v94, %v344
  %v346 = vpop.f32.mrb[0].mxu0
  %347 = vmatprep.mubr.f32.mxu0 0.0
  %348 = vmatmul.mubr.f32.gmra.mrb[0].mxu0 %v152
  %v349 = vpop.f32.mrb[0].mxu0
  %v350 = vadd.f32 %v94, %v349
  %v351 = vpop.f32.mrb[0].mxu0
  %352 = vmatprep.mubr.f32.mxu0 0.0
  %353 = vmatmul.mubr.f32.gmra.mrb[0].mxu0 %v155
  %v354 = vpop.f32.mrb[0].mxu0
  %v355 = vadd.f32 %v94, %v354
  %v356 = vpop.f32.mrb[0].mxu0
  %357 = vmatprep.mubr.f32.mxu0 0.0
  %358 = vmatmul.mubr.f32.gmra.mrb[0].mxu0 %v158
  %v359 = vpop.f32.mrb[0].mxu0
  %v360 = vadd.f32 %v94, %v359
  %v361 = vpop.f32.mrb[0].mxu0
  %362 = vmatprep.mubr.f32.mxu0 0.0
  %363 = vmatmul.mubr.f32.gmra.mrb[0].mxu0 %v161
  %v364 = vpop.f32.mrb[0].mxu0
  %v365 = vadd.f32 %v94, %v364
  %v366 = vpop.f32.mrb[0].mxu0
  %367 = vmatprep.mubr.f32.mxu0 0.0
  %368 = vmatmul.mubr.f32.gmra.mrb[0].mxu0 %v164
  %v369 = vpop.f32.mrb[0].mxu0
  %v370 = vadd.f32 %v94, %v369
  %v371 = vpop.f32.mrb[0].mxu0
  %372 = vmatprep.mubr.f32.mxu0 0.0
  %373 = vmatmul.mubr.f32.gmra.mrb[0].mxu0 %v167
  %v374 = vpop.f32.mrb[0].mxu0
  %v375 = vadd.f32 %v94, %v374
  %v376 = vpop.f32.mrb[0].mxu0
  %377 = vmatprep.mubr.f32.mxu0 0.0
  %378 = vmatmul.mubr.f32.gmra.mrb[0].mxu0 %v170
  %v379 = vpop.f32.mrb[0].mxu0
  %v380 = vadd.f32 %v94, %v379
  %v381 = vpop.f32.mrb[0].mxu0
  %382 = vmatprep.mubr.f32.mxu0 0.0
  %383 = vmatmul.mubr.f32.gmra.mrb[0].mxu0 %v173
  %v384 = vpop.f32.mrb[0].mxu0
  %v385 = vadd.f32 %v94, %v384
  %v386 = vpop.f32.mrb[0].mxu0
  %387 = vmatprep.mubr.f32.mxu0 0.0
  %388 = vmatmul.mubr.f32.gmra.mrb[0].mxu0 %v176
  %v389 = vpop.f32.mrb[0].mxu0
  %v390 = vadd.f32 %v94, %v389
  %v391 = vpop.f32.mrb[0].mxu0
  %392 = vmatprep.mubr.f32.mxu0 0.0
  %393 = vmatmul.mubr.f32.gmra.mrb[0].mxu0 %v179
  %v394 = vpop.f32.mrb[0].mxu0
  %v395 = vadd.f32 %v94, %v394
  %v396 = vpop.f32.mrb[0].mxu0
  %397 = vmatprep.mubr.f32.mxu0 0.0
  %398 = vmatmul.mubr.f32.gmra.mrb[0].mxu0 %v182
  %v399 = vpop.f32.mrb[0].mxu0
  %v400 = vadd.f32 %v94, %v399
  %v401 = vpop.f32.mrb[0].mxu0
  %402 = vmatprep.mubr.f32.mxu0 0.0
  %403 = vmatmul.mubr.f32.gmra.mrb[0].mxu0 %v185
  %v404 = vpop.f32.mrb[0].mxu0
  %v405 = vadd.f32 %v94, %v404
  %v406 = vpop.f32.mrb[0].mxu0
  %407 = vmatprep.mubr.f32.mxu0 0.0
  %408 = vmatmul.mubr.f32.gmra.mrb[0].mxu0 %v188
  %v409 = vpop.f32.mrb[0].mxu0
  %v410 = vadd.f32 %v94, %v409
  %v411 = vpop.f32.mrb[0].mxu0
  %412 = vmatprep.mubr.f32.mxu0 0.0
  %413 = vmatmul.mubr.f32.gmra.mrb[0].mxu0 %v191
  %v414 = vpop.f32.mrb[0].mxu0
  %v415 = vadd.f32 %v94, %v414
  %v416 = vpop.f32.mrb[0].mxu0
  %417 = vdwg.mxu0
  %v418 = vmax.f32 %v260, 0.0
  %v419 = vmax.f32 %v265, 0.0
  %v420 = vmax.f32 %v270, 0.0
  %v421 = vmax.f32 %v275, 0.0
  %v422 = vmax.f32 %v280, 0.0
  %v423 = vmax.f32 %v285, 0.0
  %v424 = vmax.f32 %v290, 0.0
  %v425 = vmax.f32 %v295, 0.0
  %v426 = vmax.f32 %v300, 0.0
  %v427 = vmax.f32 %v305, 0.0
  %v428 = vmax.f32 %v310, 0.0
  %v429 = vmax.f32 %v315, 0.0
  %v430 = vmax.f32 %v320, 0.0
  %v431 = vmax.f32 %v325, 0.0
  %v432 = vmax.f32 %v330, 0.0
  %v433 = vmax.f32 %v335, 0.0
  %v434 = vmax.f32 %v340, 0.0
  %v435 = vmax.f32 %v345, 0.0
  %v436 = vmax.f32 %v350, 0.0
  %v437 = vmax.f32 %v355, 0.0
  %v438 = vmax.f32 %v360, 0.0
  %v439 = vmax.f32 %v365, 0.0
  %v440 = vmax.f32 %v370, 0.0
  %v441 = vmax.f32 %v375, 0.0
  %v442 = vmax.f32 %v380, 0.0
  %v443 = vmax.f32 %v385, 0.0
  %v444 = vmax.f32 %v390, 0.0
  %v445 = vmax.f32 %v395, 0.0
  %v446 = vmax.f32 %v400, 0.0
  %v447 = vmax.f32 %v405, 0.0
  %v448 = vmax.f32 %v410, 0.0
  %v449 = vmax.f32 %v415, 0.0
  %v451 = vlaneseq
  %v452 = vshrl.u32 %v451, 7
  %v453 = vsub.s32 0, %v452
  %v454 = vrot.slane %v43, %v453
  %vm456 = vcmask 523264
  %v458 = vsel %vm456, %v418, 0
  %v461 = vsel %vm456, %v419, 0
  %v464 = vsel %vm456, %v420, 0
  %v467 = vsel %vm456, %v421, 0
  %v470 = vsel %vm456, %v422, 0
  %v473 = vsel %vm456, %v423, 0
  %v476 = vsel %vm456, %v424, 0
  %v479 = vsel %vm456, %v425, 0
  %v482 = vsel %vm456, %v426, 0
  %v485 = vsel %vm456, %v427, 0
  %v488 = vsel %vm456, %v428, 0
  %v491 = vsel %vm456, %v429, 0
  %v494 = vsel %vm456, %v430, 0
  %v497 = vsel %vm456, %v431, 0
  %v500 = vsel %vm456, %v432, 0
  %v503 = vsel %vm456, %v433, 0
  %v506 = vsel %vm456, %v434, 0
  %v509 = vsel %vm456, %v435, 0
  %v512 = vsel %vm456, %v436, 0
  %v515 = vsel %vm456, %v437, 0
  %v518 = vsel %vm456, %v438, 0
  %v521 = vsel %vm456, %v439, 0
  %v524 = vsel %vm456, %v440, 0
  %v527 = vsel %vm456, %v441, 0
  %v530 = vsel %vm456, %v442, 0
  %v533 = vsel %vm456, %v443, 0
  %v536 = vsel %vm456, %v444, 0
  %v539 = vsel %vm456, %v445, 0
  %v542 = vsel %vm456, %v446, 0
  %v545 = vsel %vm456, %v447, 0
  %v548 = vsel %vm456, %v448, 0
  %v551 = vsel %vm456, %v449, 0
  %553 = vmatprep.subr.mxu0 0.0
  %554 = vmatpush1.msra.mxu0 %v35
  %555 = vmatprep.subr.mxu0 0.0
  %556 = vmatpush1.msra.mxu0 %v36
  %557 = vmatprep.subr.mxu0 0.0
  %558 = vmatpush1.msra.mxu0 %v37
  %559 = vmatprep.subr.mxu0 0.0
  %560 = vmatpush1.msra.mxu0 %v38
  %561 = vmatprep.subr.mxu0 0.0
  %562 = vmatpush1.msra.mxu0 %v39
  %563 = vmatprep.subr.mxu0 0.0
  %564 = vmatpush1.msra.mxu0 %v40
  %565 = vmatprep.subr.mxu0 0.0
  %566 = vmatpush1.msra.mxu0 %v41
  %567 = vmatprep.subr.mxu0 0.0
  %568 = vmatpush1.msra.mxu0 %v42
  %569 = vmatprep.subr.mxu0 0.0
  %570 = vmatpush1.msra.mxu0 0.0
  %571 = vmatprep.subr.mxu0 0.0
  %572 = vmatpush1.msra.mxu0 0.0
  %573 = vmatprep.subr.mxu0 0.0
  %574 = vmatpush1.msra.mxu0 0.0
  %575 = vmatprep.subr.mxu0 0.0
  %576 = vmatpush1.msra.mxu0 0.0
  %577 = vmatprep.subr.mxu0 0.0
  %578 = vmatpush1.msra.mxu0 0.0
  %579 = vmatprep.subr.mxu0 0.0
  %580 = vmatpush1.msra.mxu0 0.0
  %581 = vmatprep.subr.mxu0 0.0
  %582 = vmatpush1.msra.mxu0 0.0
  %583 = vmatprep.subr.mxu0 0.0
  %584 = vmatpush1.msra.mxu0 0.0
  %585 = vmatprep.subr.mxu0 0.0
  %586 = vmatpush1.msra.mxu0 0.0
  %587 = vmatprep.subr.mxu0 0.0
  %588 = vmatpush1.msra.mxu0 0.0
  %589 = vmatprep.subr.mxu0 0.0
  %590 = vmatpush1.msra.mxu0 0.0
  %591 = vmatprep.subr.mxu0 0.0
  %592 = vmatpush1.msra.mxu0 0.0
  %593 = vmatprep.subr.mxu0 0.0
  %594 = vmatpush1.msra.mxu0 0.0
  %595 = vmatprep.subr.mxu0 0.0
  %596 = vmatpush1.msra.mxu0 0.0
  %597 = vmatprep.subr.mxu0 0.0
  %598 = vmatpush1.msra.mxu0 0.0
  %599 = vmatprep.subr.mxu0 0.0
  %600 = vmatpush1.msra.mxu0 0.0
  %601 = vmatprep.subr.mxu0 0.0
  %602 = vmatpush1.msra.mxu0 0.0
  %603 = vmatprep.subr.mxu0 0.0
  %604 = vmatpush1.msra.mxu0 0.0
  %605 = vmatprep.subr.mxu0 0.0
  %606 = vmatpush1.msra.mxu0 0.0
  %607 = vmatprep.subr.mxu0 0.0
  %608 = vmatpush1.msra.mxu0 0.0
  %609 = vmatprep.subr.mxu0 0.0
  %610 = vmatpush1.msra.mxu0 0.0
  %611 = vmatprep.subr.mxu0 0.0
  %612 = vmatpush1.msra.mxu0 0.0
  %613 = vmatprep.subr.mxu0 0.0
  %614 = vmatpush1.msra.mxu0 0.0
  %615 = vmatprep.subr.mxu0 0.0
  %616 = vmatpush1.msra.mxu0 0.0
  %617 = vmatprep.mubr.f32.mxu0 0.0
  %618 = vmatmul.mubr.f32.gmra.mrb[0].mxu0 %v458
  %v619 = vpop.f32.mrb[0].mxu0
  %v620 = vadd.f32 %v454, %v619
  %v621 = vpop.f32.mrb[0].mxu0
  %622 = vmatprep.mubr.f32.mxu0 0.0
  %623 = vmatmul.mubr.f32.gmra.mrb[0].mxu0 %v461
  %v624 = vpop.f32.mrb[0].mxu0
  %v625 = vadd.f32 %v454, %v624
  %v626 = vpop.f32.mrb[0].mxu0
  %627 = vmatprep.mubr.f32.mxu0 0.0
  %628 = vmatmul.mubr.f32.gmra.mrb[0].mxu0 %v464
  %v629 = vpop.f32.mrb[0].mxu0
  %v630 = vadd.f32 %v454, %v629
  %v631 = vpop.f32.mrb[0].mxu0
  %632 = vmatprep.mubr.f32.mxu0 0.0
  %633 = vmatmul.mubr.f32.gmra.mrb[0].mxu0 %v467
  %v634 = vpop.f32.mrb[0].mxu0
  %v635 = vadd.f32 %v454, %v634
  %v636 = vpop.f32.mrb[0].mxu0
  %637 = vmatprep.mubr.f32.mxu0 0.0
  %638 = vmatmul.mubr.f32.gmra.mrb[0].mxu0 %v470
  %v639 = vpop.f32.mrb[0].mxu0
  %v640 = vadd.f32 %v454, %v639
  %v641 = vpop.f32.mrb[0].mxu0
  %642 = vmatprep.mubr.f32.mxu0 0.0
  %643 = vmatmul.mubr.f32.gmra.mrb[0].mxu0 %v473
  %v644 = vpop.f32.mrb[0].mxu0
  %v645 = vadd.f32 %v454, %v644
  %v646 = vpop.f32.mrb[0].mxu0
  %647 = vmatprep.mubr.f32.mxu0 0.0
  %648 = vmatmul.mubr.f32.gmra.mrb[0].mxu0 %v476
  %v649 = vpop.f32.mrb[0].mxu0
  %v650 = vadd.f32 %v454, %v649
  %v651 = vpop.f32.mrb[0].mxu0
  %652 = vmatprep.mubr.f32.mxu0 0.0
  %653 = vmatmul.mubr.f32.gmra.mrb[0].mxu0 %v479
  %v654 = vpop.f32.mrb[0].mxu0
  %v655 = vadd.f32 %v454, %v654
  %v656 = vpop.f32.mrb[0].mxu0
  %657 = vmatprep.mubr.f32.mxu0 0.0
  %658 = vmatmul.mubr.f32.gmra.mrb[0].mxu0 %v482
  %v659 = vpop.f32.mrb[0].mxu0
  %v660 = vadd.f32 %v454, %v659
  %v661 = vpop.f32.mrb[0].mxu0
  %662 = vmatprep.mubr.f32.mxu0 0.0
  %663 = vmatmul.mubr.f32.gmra.mrb[0].mxu0 %v485
  %v664 = vpop.f32.mrb[0].mxu0
  %v665 = vadd.f32 %v454, %v664
  %v666 = vpop.f32.mrb[0].mxu0
  %667 = vmatprep.mubr.f32.mxu0 0.0
  %668 = vmatmul.mubr.f32.gmra.mrb[0].mxu0 %v488
  %v669 = vpop.f32.mrb[0].mxu0
  %v670 = vadd.f32 %v454, %v669
  %v671 = vpop.f32.mrb[0].mxu0
  %672 = vmatprep.mubr.f32.mxu0 0.0
  %673 = vmatmul.mubr.f32.gmra.mrb[0].mxu0 %v491
  %v674 = vpop.f32.mrb[0].mxu0
  %v675 = vadd.f32 %v454, %v674
  %v676 = vpop.f32.mrb[0].mxu0
  %677 = vmatprep.mubr.f32.mxu0 0.0
  %678 = vmatmul.mubr.f32.gmra.mrb[0].mxu0 %v494
  %v679 = vpop.f32.mrb[0].mxu0
  %v680 = vadd.f32 %v454, %v679
  %v681 = vpop.f32.mrb[0].mxu0
  %682 = vmatprep.mubr.f32.mxu0 0.0
  %683 = vmatmul.mubr.f32.gmra.mrb[0].mxu0 %v497
  %v684 = vpop.f32.mrb[0].mxu0
  %v685 = vadd.f32 %v454, %v684
  %v686 = vpop.f32.mrb[0].mxu0
  %687 = vmatprep.mubr.f32.mxu0 0.0
  %688 = vmatmul.mubr.f32.gmra.mrb[0].mxu0 %v500
  %v689 = vpop.f32.mrb[0].mxu0
  %v690 = vadd.f32 %v454, %v689
  %v691 = vpop.f32.mrb[0].mxu0
  %692 = vmatprep.mubr.f32.mxu0 0.0
  %693 = vmatmul.mubr.f32.gmra.mrb[0].mxu0 %v503
  %v694 = vpop.f32.mrb[0].mxu0
  %v695 = vadd.f32 %v454, %v694
  %v696 = vpop.f32.mrb[0].mxu0
  %697 = vmatprep.mubr.f32.mxu0 0.0
  %698 = vmatmul.mubr.f32.gmra.mrb[0].mxu0 %v506
  %v699 = vpop.f32.mrb[0].mxu0
  %v700 = vadd.f32 %v454, %v699
  %v701 = vpop.f32.mrb[0].mxu0
  %702 = vmatprep.mubr.f32.mxu0 0.0
  %703 = vmatmul.mubr.f32.gmra.mrb[0].mxu0 %v509
  %v704 = vpop.f32.mrb[0].mxu0
  %v705 = vadd.f32 %v454, %v704
  %v706 = vpop.f32.mrb[0].mxu0
  %707 = vmatprep.mubr.f32.mxu0 0.0
  %708 = vmatmul.mubr.f32.gmra.mrb[0].mxu0 %v512
  %v709 = vpop.f32.mrb[0].mxu0
  %v710 = vadd.f32 %v454, %v709
  %v711 = vpop.f32.mrb[0].mxu0
  %712 = vmatprep.mubr.f32.mxu0 0.0
  %713 = vmatmul.mubr.f32.gmra.mrb[0].mxu0 %v515
  %v714 = vpop.f32.mrb[0].mxu0
  %v715 = vadd.f32 %v454, %v714
  %v716 = vpop.f32.mrb[0].mxu0
  %717 = vmatprep.mubr.f32.mxu0 0.0
  %718 = vmatmul.mubr.f32.gmra.mrb[0].mxu0 %v518
  %v719 = vpop.f32.mrb[0].mxu0
  %v720 = vadd.f32 %v454, %v719
  %v721 = vpop.f32.mrb[0].mxu0
  %722 = vmatprep.mubr.f32.mxu0 0.0
  %723 = vmatmul.mubr.f32.gmra.mrb[0].mxu0 %v521
  %v724 = vpop.f32.mrb[0].mxu0
  %v725 = vadd.f32 %v454, %v724
  %v726 = vpop.f32.mrb[0].mxu0
  %727 = vmatprep.mubr.f32.mxu0 0.0
  %728 = vmatmul.mubr.f32.gmra.mrb[0].mxu0 %v524
  %v729 = vpop.f32.mrb[0].mxu0
  %v730 = vadd.f32 %v454, %v729
  %v731 = vpop.f32.mrb[0].mxu0
  %732 = vmatprep.mubr.f32.mxu0 0.0
  %733 = vmatmul.mubr.f32.gmra.mrb[0].mxu0 %v527
  %v734 = vpop.f32.mrb[0].mxu0
  %v735 = vadd.f32 %v454, %v734
  %v736 = vpop.f32.mrb[0].mxu0
  %737 = vmatprep.mubr.f32.mxu0 0.0
  %738 = vmatmul.mubr.f32.gmra.mrb[0].mxu0 %v530
  %v739 = vpop.f32.mrb[0].mxu0
  %v740 = vadd.f32 %v454, %v739
  %v741 = vpop.f32.mrb[0].mxu0
  %742 = vmatprep.mubr.f32.mxu0 0.0
  %743 = vmatmul.mubr.f32.gmra.mrb[0].mxu0 %v533
  %v744 = vpop.f32.mrb[0].mxu0
  %v745 = vadd.f32 %v454, %v744
  %v746 = vpop.f32.mrb[0].mxu0
  %747 = vmatprep.mubr.f32.mxu0 0.0
  %748 = vmatmul.mubr.f32.gmra.mrb[0].mxu0 %v536
  %v749 = vpop.f32.mrb[0].mxu0
  %v750 = vadd.f32 %v454, %v749
  %v751 = vpop.f32.mrb[0].mxu0
  %752 = vmatprep.mubr.f32.mxu0 0.0
  %753 = vmatmul.mubr.f32.gmra.mrb[0].mxu0 %v539
  %v754 = vpop.f32.mrb[0].mxu0
  %v755 = vadd.f32 %v454, %v754
  %v756 = vpop.f32.mrb[0].mxu0
  %757 = vmatprep.mubr.f32.mxu0 0.0
  %758 = vmatmul.mubr.f32.gmra.mrb[0].mxu0 %v542
  %v759 = vpop.f32.mrb[0].mxu0
  %v760 = vadd.f32 %v454, %v759
  %v761 = vpop.f32.mrb[0].mxu0
  %762 = vmatprep.mubr.f32.mxu0 0.0
  %763 = vmatmul.mubr.f32.gmra.mrb[0].mxu0 %v545
  %v764 = vpop.f32.mrb[0].mxu0
  %v765 = vadd.f32 %v454, %v764
  %v766 = vpop.f32.mrb[0].mxu0
  %767 = vmatprep.mubr.f32.mxu0 0.0
  %768 = vmatmul.mubr.f32.gmra.mrb[0].mxu0 %v548
  %v769 = vpop.f32.mrb[0].mxu0
  %v770 = vadd.f32 %v454, %v769
  %v771 = vpop.f32.mrb[0].mxu0
  %772 = vmatprep.mubr.f32.mxu0 0.0
  %773 = vmatmul.mubr.f32.gmra.mrb[0].mxu0 %v551
  %v774 = vpop.f32.mrb[0].mxu0
  %v775 = vadd.f32 %v454, %v774
  %v776 = vpop.f32.mrb[0].mxu0
  %777 = vdwg.mxu0
  %v778 = vmax.f32 %v620, 0.0
  %v779 = vmax.f32 %v625, 0.0
  %v780 = vmax.f32 %v630, 0.0
  %v781 = vmax.f32 %v635, 0.0
  %v782 = vmax.f32 %v640, 0.0
  %v783 = vmax.f32 %v645, 0.0
  %v784 = vmax.f32 %v650, 0.0
  %v785 = vmax.f32 %v655, 0.0
  %v786 = vmax.f32 %v660, 0.0
  %v787 = vmax.f32 %v665, 0.0
  %v788 = vmax.f32 %v670, 0.0
  %v789 = vmax.f32 %v675, 0.0
  %v790 = vmax.f32 %v680, 0.0
  %v791 = vmax.f32 %v685, 0.0
  %v792 = vmax.f32 %v690, 0.0
  %v793 = vmax.f32 %v695, 0.0
  %v794 = vmax.f32 %v700, 0.0
  %v795 = vmax.f32 %v705, 0.0
  %v796 = vmax.f32 %v710, 0.0
  %v797 = vmax.f32 %v715, 0.0
  %v798 = vmax.f32 %v720, 0.0
  %v799 = vmax.f32 %v725, 0.0
  %v800 = vmax.f32 %v730, 0.0
  %v801 = vmax.f32 %v735, 0.0
  %v802 = vmax.f32 %v740, 0.0
  %v803 = vmax.f32 %v745, 0.0
  %v804 = vmax.f32 %v750, 0.0
  %v805 = vmax.f32 %v755, 0.0
  %v806 = vmax.f32 %v760, 0.0
  %v807 = vmax.f32 %v765, 0.0
  %v808 = vmax.f32 %v770, 0.0
  %v809 = vmax.f32 %v775, 0.0
  %v811 = vlaneseq
  %v812 = vshrl.u32 %v811, 7
  %v813 = vsub.s32 0, %v812
  %v814 = vrot.slane %v52, %v813
  %v817 = vsel %vm456, %v778, 0
  %v820 = vsel %vm456, %v779, 0
  %v823 = vsel %vm456, %v780, 0
  %v826 = vsel %vm456, %v781, 0
  %v829 = vsel %vm456, %v782, 0
  %v832 = vsel %vm456, %v783, 0
  %v835 = vsel %vm456, %v784, 0
  %v838 = vsel %vm456, %v785, 0
  %v841 = vsel %vm456, %v786, 0
  %v844 = vsel %vm456, %v787, 0
  %v847 = vsel %vm456, %v788, 0
  %v850 = vsel %vm456, %v789, 0
  %v853 = vsel %vm456, %v790, 0
  %v856 = vsel %vm456, %v791, 0
  %v859 = vsel %vm456, %v792, 0
  %v862 = vsel %vm456, %v793, 0
  %v865 = vsel %vm456, %v794, 0
  %v868 = vsel %vm456, %v795, 0
  %v871 = vsel %vm456, %v796, 0
  %v874 = vsel %vm456, %v797, 0
  %v877 = vsel %vm456, %v798, 0
  %v880 = vsel %vm456, %v799, 0
  %v883 = vsel %vm456, %v800, 0
  %v886 = vsel %vm456, %v801, 0
  %v889 = vsel %vm456, %v802, 0
  %v892 = vsel %vm456, %v803, 0
  %v895 = vsel %vm456, %v804, 0
  %v898 = vsel %vm456, %v805, 0
  %v901 = vsel %vm456, %v806, 0
  %v904 = vsel %vm456, %v807, 0
  %v907 = vsel %vm456, %v808, 0
  %v910 = vsel %vm456, %v809, 0
  %912 = vmatprep.subr.mxu0 0.0
  %913 = vmatpush1.msra.mxu0 %v44
  %914 = vmatprep.subr.mxu0 0.0
  %915 = vmatpush1.msra.mxu0 %v45
  %916 = vmatprep.subr.mxu0 0.0
  %917 = vmatpush1.msra.mxu0 %v46
  %918 = vmatprep.subr.mxu0 0.0
  %919 = vmatpush1.msra.mxu0 %v47
  %920 = vmatprep.subr.mxu0 0.0
  %921 = vmatpush1.msra.mxu0 %v48
  %922 = vmatprep.subr.mxu0 0.0
  %923 = vmatpush1.msra.mxu0 %v49
  %924 = vmatprep.subr.mxu0 0.0
  %925 = vmatpush1.msra.mxu0 %v50
  %926 = vmatprep.subr.mxu0 0.0
  %927 = vmatpush1.msra.mxu0 %v51
  %928 = vmatprep.subr.mxu0 0.0
  %929 = vmatpush1.msra.mxu0 0.0
  %930 = vmatprep.subr.mxu0 0.0
  %931 = vmatpush1.msra.mxu0 0.0
  %932 = vmatprep.subr.mxu0 0.0
  %933 = vmatpush1.msra.mxu0 0.0
  %934 = vmatprep.subr.mxu0 0.0
  %935 = vmatpush1.msra.mxu0 0.0
  %936 = vmatprep.subr.mxu0 0.0
  %937 = vmatpush1.msra.mxu0 0.0
  %938 = vmatprep.subr.mxu0 0.0
  %939 = vmatpush1.msra.mxu0 0.0
  %940 = vmatprep.subr.mxu0 0.0
  %941 = vmatpush1.msra.mxu0 0.0
  %942 = vmatprep.subr.mxu0 0.0
  %943 = vmatpush1.msra.mxu0 0.0
  %944 = vmatprep.subr.mxu0 0.0
  %945 = vmatpush1.msra.mxu0 0.0
  %946 = vmatprep.subr.mxu0 0.0
  %947 = vmatpush1.msra.mxu0 0.0
  %948 = vmatprep.subr.mxu0 0.0
  %949 = vmatpush1.msra.mxu0 0.0
  %950 = vmatprep.subr.mxu0 0.0
  %951 = vmatpush1.msra.mxu0 0.0
  %952 = vmatprep.subr.mxu0 0.0
  %953 = vmatpush1.msra.mxu0 0.0
  %954 = vmatprep.subr.mxu0 0.0
  %955 = vmatpush1.msra.mxu0 0.0
  %956 = vmatprep.subr.mxu0 0.0
  %957 = vmatpush1.msra.mxu0 0.0
  %958 = vmatprep.subr.mxu0 0.0
  %959 = vmatpush1.msra.mxu0 0.0
  %960 = vmatprep.subr.mxu0 0.0
  %961 = vmatpush1.msra.mxu0 0.0
  %962 = vmatprep.subr.mxu0 0.0
  %963 = vmatpush1.msra.mxu0 0.0
  %964 = vmatprep.subr.mxu0 0.0
  %965 = vmatpush1.msra.mxu0 0.0
  %966 = vmatprep.subr.mxu0 0.0
  %967 = vmatpush1.msra.mxu0 0.0
  %968 = vmatprep.subr.mxu0 0.0
  %969 = vmatpush1.msra.mxu0 0.0
  %970 = vmatprep.subr.mxu0 0.0
  %971 = vmatpush1.msra.mxu0 0.0
  %972 = vmatprep.subr.mxu0 0.0
  %973 = vmatpush1.msra.mxu0 0.0
  %974 = vmatprep.subr.mxu0 0.0
  %975 = vmatpush1.msra.mxu0 0.0
  %976 = vmatprep.mubr.f32.mxu0 0.0
  %977 = vmatmul.mubr.f32.gmra.mrb[0].mxu0 %v817
  %v978 = vpop.f32.mrb[0].mxu0
  %v979 = vadd.f32 %v814, %v978
  %v980 = vpop.f32.mrb[0].mxu0
  %981 = vmatprep.mubr.f32.mxu0 0.0
  %982 = vmatmul.mubr.f32.gmra.mrb[0].mxu0 %v820
  %v983 = vpop.f32.mrb[0].mxu0
  %v984 = vadd.f32 %v814, %v983
  %v985 = vpop.f32.mrb[0].mxu0
  %986 = vmatprep.mubr.f32.mxu0 0.0
  %987 = vmatmul.mubr.f32.gmra.mrb[0].mxu0 %v823
  %v988 = vpop.f32.mrb[0].mxu0
  %v989 = vadd.f32 %v814, %v988
  %v990 = vpop.f32.mrb[0].mxu0
  %991 = vmatprep.mubr.f32.mxu0 0.0
  %992 = vmatmul.mubr.f32.gmra.mrb[0].mxu0 %v826
  %v993 = vpop.f32.mrb[0].mxu0
  %v994 = vadd.f32 %v814, %v993
  %v995 = vpop.f32.mrb[0].mxu0
  %996 = vmatprep.mubr.f32.mxu0 0.0
  %997 = vmatmul.mubr.f32.gmra.mrb[0].mxu0 %v829
  %v998 = vpop.f32.mrb[0].mxu0
  %v999 = vadd.f32 %v814, %v998
  %v1000 = vpop.f32.mrb[0].mxu0
  %1001 = vmatprep.mubr.f32.mxu0 0.0
  %1002 = vmatmul.mubr.f32.gmra.mrb[0].mxu0 %v832
  %v1003 = vpop.f32.mrb[0].mxu0
  %v1004 = vadd.f32 %v814, %v1003
  %v1005 = vpop.f32.mrb[0].mxu0
  %1006 = vmatprep.mubr.f32.mxu0 0.0
  %1007 = vmatmul.mubr.f32.gmra.mrb[0].mxu0 %v835
  %v1008 = vpop.f32.mrb[0].mxu0
  %v1009 = vadd.f32 %v814, %v1008
  %v1010 = vpop.f32.mrb[0].mxu0
  %1011 = vmatprep.mubr.f32.mxu0 0.0
  %1012 = vmatmul.mubr.f32.gmra.mrb[0].mxu0 %v838
  %v1013 = vpop.f32.mrb[0].mxu0
  %v1014 = vadd.f32 %v814, %v1013
  %v1015 = vpop.f32.mrb[0].mxu0
  %1016 = vmatprep.mubr.f32.mxu0 0.0
  %1017 = vmatmul.mubr.f32.gmra.mrb[0].mxu0 %v841
  %v1018 = vpop.f32.mrb[0].mxu0
  %v1019 = vadd.f32 %v814, %v1018
  %v1020 = vpop.f32.mrb[0].mxu0
  %1021 = vmatprep.mubr.f32.mxu0 0.0
  %1022 = vmatmul.mubr.f32.gmra.mrb[0].mxu0 %v844
  %v1023 = vpop.f32.mrb[0].mxu0
  %v1024 = vadd.f32 %v814, %v1023
  %v1025 = vpop.f32.mrb[0].mxu0
  %1026 = vmatprep.mubr.f32.mxu0 0.0
  %1027 = vmatmul.mubr.f32.gmra.mrb[0].mxu0 %v847
  %v1028 = vpop.f32.mrb[0].mxu0
  %v1029 = vadd.f32 %v814, %v1028
  %v1030 = vpop.f32.mrb[0].mxu0
  %1031 = vmatprep.mubr.f32.mxu0 0.0
  %1032 = vmatmul.mubr.f32.gmra.mrb[0].mxu0 %v850
  %v1033 = vpop.f32.mrb[0].mxu0
  %v1034 = vadd.f32 %v814, %v1033
  %v1035 = vpop.f32.mrb[0].mxu0
  %1036 = vmatprep.mubr.f32.mxu0 0.0
  %1037 = vmatmul.mubr.f32.gmra.mrb[0].mxu0 %v853
  %v1038 = vpop.f32.mrb[0].mxu0
  %v1039 = vadd.f32 %v814, %v1038
  %v1040 = vpop.f32.mrb[0].mxu0
  %1041 = vmatprep.mubr.f32.mxu0 0.0
  %1042 = vmatmul.mubr.f32.gmra.mrb[0].mxu0 %v856
  %v1043 = vpop.f32.mrb[0].mxu0
  %v1044 = vadd.f32 %v814, %v1043
  %v1045 = vpop.f32.mrb[0].mxu0
  %1046 = vmatprep.mubr.f32.mxu0 0.0
  %1047 = vmatmul.mubr.f32.gmra.mrb[0].mxu0 %v859
  %v1048 = vpop.f32.mrb[0].mxu0
  %v1049 = vadd.f32 %v814, %v1048
  %v1050 = vpop.f32.mrb[0].mxu0
  %1051 = vmatprep.mubr.f32.mxu0 0.0
  %1052 = vmatmul.mubr.f32.gmra.mrb[0].mxu0 %v862
  %v1053 = vpop.f32.mrb[0].mxu0
  %v1054 = vadd.f32 %v814, %v1053
  %v1055 = vpop.f32.mrb[0].mxu0
  %1056 = vmatprep.mubr.f32.mxu0 0.0
  %1057 = vmatmul.mubr.f32.gmra.mrb[0].mxu0 %v865
  %v1058 = vpop.f32.mrb[0].mxu0
  %v1059 = vadd.f32 %v814, %v1058
  %v1060 = vpop.f32.mrb[0].mxu0
  %1061 = vmatprep.mubr.f32.mxu0 0.0
  %1062 = vmatmul.mubr.f32.gmra.mrb[0].mxu0 %v868
  %v1063 = vpop.f32.mrb[0].mxu0
  %v1064 = vadd.f32 %v814, %v1063
  %v1065 = vpop.f32.mrb[0].mxu0
  %1066 = vmatprep.mubr.f32.mxu0 0.0
  %1067 = vmatmul.mubr.f32.gmra.mrb[0].mxu0 %v871
  %v1068 = vpop.f32.mrb[0].mxu0
  %v1069 = vadd.f32 %v814, %v1068
  %v1070 = vpop.f32.mrb[0].mxu0
  %1071 = vmatprep.mubr.f32.mxu0 0.0
  %1072 = vmatmul.mubr.f32.gmra.mrb[0].mxu0 %v874
  %v1073 = vpop.f32.mrb[0].mxu0
  %v1074 = vadd.f32 %v814, %v1073
  %v1075 = vpop.f32.mrb[0].mxu0
  %1076 = vmatprep.mubr.f32.mxu0 0.0
  %1077 = vmatmul.mubr.f32.gmra.mrb[0].mxu0 %v877
  %v1078 = vpop.f32.mrb[0].mxu0
  %v1079 = vadd.f32 %v814, %v1078
  %v1080 = vpop.f32.mrb[0].mxu0
  %1081 = vmatprep.mubr.f32.mxu0 0.0
  %1082 = vmatmul.mubr.f32.gmra.mrb[0].mxu0 %v880
  %v1083 = vpop.f32.mrb[0].mxu0
  %v1084 = vadd.f32 %v814, %v1083
  %v1085 = vpop.f32.mrb[0].mxu0
  %1086 = vmatprep.mubr.f32.mxu0 0.0
  %1087 = vmatmul.mubr.f32.gmra.mrb[0].mxu0 %v883
  %v1088 = vpop.f32.mrb[0].mxu0
  %v1089 = vadd.f32 %v814, %v1088
  %v1090 = vpop.f32.mrb[0].mxu0
  %1091 = vmatprep.mubr.f32.mxu0 0.0
  %1092 = vmatmul.mubr.f32.gmra.mrb[0].mxu0 %v886
  %v1093 = vpop.f32.mrb[0].mxu0
  %v1094 = vadd.f32 %v814, %v1093
  %v1095 = vpop.f32.mrb[0].mxu0
  %1096 = vmatprep.mubr.f32.mxu0 0.0
  %1097 = vmatmul.mubr.f32.gmra.mrb[0].mxu0 %v889
  %v1098 = vpop.f32.mrb[0].mxu0
  %v1099 = vadd.f32 %v814, %v1098
  %v1100 = vpop.f32.mrb[0].mxu0
  %1101 = vmatprep.mubr.f32.mxu0 0.0
  %1102 = vmatmul.mubr.f32.gmra.mrb[0].mxu0 %v892
  %v1103 = vpop.f32.mrb[0].mxu0
  %v1104 = vadd.f32 %v814, %v1103
  %v1105 = vpop.f32.mrb[0].mxu0
  %1106 = vmatprep.mubr.f32.mxu0 0.0
  %1107 = vmatmul.mubr.f32.gmra.mrb[0].mxu0 %v895
  %v1108 = vpop.f32.mrb[0].mxu0
  %v1109 = vadd.f32 %v814, %v1108
  %v1110 = vpop.f32.mrb[0].mxu0
  %1111 = vmatprep.mubr.f32.mxu0 0.0
  %1112 = vmatmul.mubr.f32.gmra.mrb[0].mxu0 %v898
  %v1113 = vpop.f32.mrb[0].mxu0
  %v1114 = vadd.f32 %v814, %v1113
  %v1115 = vpop.f32.mrb[0].mxu0
  %1116 = vmatprep.mubr.f32.mxu0 0.0
  %1117 = vmatmul.mubr.f32.gmra.mrb[0].mxu0 %v901
  %v1118 = vpop.f32.mrb[0].mxu0
  %v1119 = vadd.f32 %v814, %v1118
  %v1120 = vpop.f32.mrb[0].mxu0
  %1121 = vmatprep.mubr.f32.mxu0 0.0
  %1122 = vmatmul.mubr.f32.gmra.mrb[0].mxu0 %v904
  %v1123 = vpop.f32.mrb[0].mxu0
  %v1124 = vadd.f32 %v814, %v1123
  %v1125 = vpop.f32.mrb[0].mxu0
  %1126 = vmatprep.mubr.f32.mxu0 0.0
  %1127 = vmatmul.mubr.f32.gmra.mrb[0].mxu0 %v907
  %v1128 = vpop.f32.mrb[0].mxu0
  %v1129 = vadd.f32 %v814, %v1128
  %v1130 = vpop.f32.mrb[0].mxu0
  %1131 = vmatprep.mubr.f32.mxu0 0.0
  %1132 = vmatmul.mubr.f32.gmra.mrb[0].mxu0 %v910
  %v1133 = vpop.f32.mrb[0].mxu0
  %v1134 = vadd.f32 %v814, %v1133
  %v1135 = vpop.f32.mrb[0].mxu0
  %1136 = vdwg.mxu0
  %v1137 = vmax.f32 %v979, 0.0
  %v1138 = vmax.f32 %v984, 0.0
  %v1139 = vmax.f32 %v989, 0.0
  %v1140 = vmax.f32 %v994, 0.0
  %v1141 = vmax.f32 %v999, 0.0
  %v1142 = vmax.f32 %v1004, 0.0
  %v1143 = vmax.f32 %v1009, 0.0
  %v1144 = vmax.f32 %v1014, 0.0
  %v1145 = vmax.f32 %v1019, 0.0
  %v1146 = vmax.f32 %v1024, 0.0
  %v1147 = vmax.f32 %v1029, 0.0
  %v1148 = vmax.f32 %v1034, 0.0
  %v1149 = vmax.f32 %v1039, 0.0
  %v1150 = vmax.f32 %v1044, 0.0
  %v1151 = vmax.f32 %v1049, 0.0
  %v1152 = vmax.f32 %v1054, 0.0
  %v1153 = vmax.f32 %v1059, 0.0
  %v1154 = vmax.f32 %v1064, 0.0
  %v1155 = vmax.f32 %v1069, 0.0
  %v1156 = vmax.f32 %v1074, 0.0
  %v1157 = vmax.f32 %v1079, 0.0
  %v1158 = vmax.f32 %v1084, 0.0
  %v1159 = vmax.f32 %v1089, 0.0
  %v1160 = vmax.f32 %v1094, 0.0
  %v1161 = vmax.f32 %v1099, 0.0
  %v1162 = vmax.f32 %v1104, 0.0
  %v1163 = vmax.f32 %v1109, 0.0
  %v1164 = vmax.f32 %v1114, 0.0
  %v1165 = vmax.f32 %v1119, 0.0
  %v1166 = vmax.f32 %v1124, 0.0
  %v1167 = vmax.f32 %v1129, 0.0
  %v1168 = vmax.f32 %v1134, 0.0
  %v1170 = vlaneseq
  %v1171 = vshrl.u32 %v1170, 7
  %v1172 = vsub.s32 0, %v1171
  %v1173 = vrot.slane %v57, %v1172
  %vm1175 = vcmask 261120
  %v1177 = vsel %vm1175, %v1137, 0
  %v1180 = vsel %vm1175, %v1138, 0
  %v1183 = vsel %vm1175, %v1139, 0
  %v1186 = vsel %vm1175, %v1140, 0
  %v1189 = vsel %vm1175, %v1141, 0
  %v1192 = vsel %vm1175, %v1142, 0
  %v1195 = vsel %vm1175, %v1143, 0
  %v1198 = vsel %vm1175, %v1144, 0
  %v1201 = vsel %vm1175, %v1145, 0
  %v1204 = vsel %vm1175, %v1146, 0
  %v1207 = vsel %vm1175, %v1147, 0
  %v1210 = vsel %vm1175, %v1148, 0
  %v1213 = vsel %vm1175, %v1149, 0
  %v1216 = vsel %vm1175, %v1150, 0
  %v1219 = vsel %vm1175, %v1151, 0
  %v1222 = vsel %vm1175, %v1152, 0
  %v1225 = vsel %vm1175, %v1153, 0
  %v1228 = vsel %vm1175, %v1154, 0
  %v1231 = vsel %vm1175, %v1155, 0
  %v1234 = vsel %vm1175, %v1156, 0
  %v1237 = vsel %vm1175, %v1157, 0
  %v1240 = vsel %vm1175, %v1158, 0
  %v1243 = vsel %vm1175, %v1159, 0
  %v1246 = vsel %vm1175, %v1160, 0
  %v1249 = vsel %vm1175, %v1161, 0
  %v1252 = vsel %vm1175, %v1162, 0
  %v1255 = vsel %vm1175, %v1163, 0
  %v1258 = vsel %vm1175, %v1164, 0
  %v1261 = vsel %vm1175, %v1165, 0
  %v1264 = vsel %vm1175, %v1166, 0
  %v1267 = vsel %vm1175, %v1167, 0
  %v1270 = vsel %vm1175, %v1168, 0
  %1272 = vmatprep.subr.mxu0 0.0
  %1273 = vmatpush1.msra.mxu0 %v53
  %1274 = vmatprep.subr.mxu0 0.0
  %1275 = vmatpush1.msra.mxu0 %v54
  %1276 = vmatprep.subr.mxu0 0.0
  %1277 = vmatpush1.msra.mxu0 %v55
  %1278 = vmatprep.subr.mxu0 0.0
  %1279 = vmatpush1.msra.mxu0 %v56
  %1280 = vmatprep.subr.mxu0 0.0
  %1281 = vmatpush1.msra.mxu0 0.0
  %1282 = vmatprep.subr.mxu0 0.0
  %1283 = vmatpush1.msra.mxu0 0.0
  %1284 = vmatprep.subr.mxu0 0.0
  %1285 = vmatpush1.msra.mxu0 0.0
  %1286 = vmatprep.subr.mxu0 0.0
  %1287 = vmatpush1.msra.mxu0 0.0
  %1288 = vmatprep.subr.mxu0 0.0
  %1289 = vmatpush1.msra.mxu0 0.0
  %1290 = vmatprep.subr.mxu0 0.0
  %1291 = vmatpush1.msra.mxu0 0.0
  %1292 = vmatprep.subr.mxu0 0.0
  %1293 = vmatpush1.msra.mxu0 0.0
  %1294 = vmatprep.subr.mxu0 0.0
  %1295 = vmatpush1.msra.mxu0 0.0
  %1296 = vmatprep.subr.mxu0 0.0
  %1297 = vmatpush1.msra.mxu0 0.0
  %1298 = vmatprep.subr.mxu0 0.0
  %1299 = vmatpush1.msra.mxu0 0.0
  %1300 = vmatprep.subr.mxu0 0.0
  %1301 = vmatpush1.msra.mxu0 0.0
  %1302 = vmatprep.subr.mxu0 0.0
  %1303 = vmatpush1.msra.mxu0 0.0
  %1304 = vmatprep.subr.mxu0 0.0
  %1305 = vmatpush1.msra.mxu0 0.0
  %1306 = vmatprep.subr.mxu0 0.0
  %1307 = vmatpush1.msra.mxu0 0.0
  %1308 = vmatprep.subr.mxu0 0.0
  %1309 = vmatpush1.msra.mxu0 0.0
  %1310 = vmatprep.subr.mxu0 0.0
  %1311 = vmatpush1.msra.mxu0 0.0
  %1312 = vmatprep.subr.mxu0 0.0
  %1313 = vmatpush1.msra.mxu0 0.0
  %1314 = vmatprep.subr.mxu0 0.0
  %1315 = vmatpush1.msra.mxu0 0.0
  %1316 = vmatprep.subr.mxu0 0.0
  %1317 = vmatpush1.msra.mxu0 0.0
  %1318 = vmatprep.subr.mxu0 0.0
  %1319 = vmatpush1.msra.mxu0 0.0
  %1320 = vmatprep.subr.mxu0 0.0
  %1321 = vmatpush1.msra.mxu0 0.0
  %1322 = vmatprep.subr.mxu0 0.0
  %1323 = vmatpush1.msra.mxu0 0.0
  %1324 = vmatprep.subr.mxu0 0.0
  %1325 = vmatpush1.msra.mxu0 0.0
  %1326 = vmatprep.subr.mxu0 0.0
  %1327 = vmatpush1.msra.mxu0 0.0
  %1328 = vmatprep.subr.mxu0 0.0
  %1329 = vmatpush1.msra.mxu0 0.0
  %1330 = vmatprep.subr.mxu0 0.0
  %1331 = vmatpush1.msra.mxu0 0.0
  %1332 = vmatprep.subr.mxu0 0.0
  %1333 = vmatpush1.msra.mxu0 0.0
  %1334 = vmatprep.subr.mxu0 0.0
  %1335 = vmatpush1.msra.mxu0 0.0
  %1336 = vmatprep.mubr.f32.mxu0 0.0
  %1337 = vmatmul.mubr.f32.gmra.mrb[0].mxu0 %v1177
  %v1338 = vpop.f32.mrb[0].mxu0
  %v1339 = vadd.f32 %v1173, %v1338
  %v1340 = vpop.f32.mrb[0].mxu0
  %1341 = vmatprep.mubr.f32.mxu0 0.0
  %1342 = vmatmul.mubr.f32.gmra.mrb[0].mxu0 %v1180
  %v1343 = vpop.f32.mrb[0].mxu0
  %v1344 = vadd.f32 %v1173, %v1343
  %v1345 = vpop.f32.mrb[0].mxu0
  %1346 = vmatprep.mubr.f32.mxu0 0.0
  %1347 = vmatmul.mubr.f32.gmra.mrb[0].mxu0 %v1183
  %v1348 = vpop.f32.mrb[0].mxu0
  %v1349 = vadd.f32 %v1173, %v1348
  %v1350 = vpop.f32.mrb[0].mxu0
  %1351 = vmatprep.mubr.f32.mxu0 0.0
  %1352 = vmatmul.mubr.f32.gmra.mrb[0].mxu0 %v1186
  %v1353 = vpop.f32.mrb[0].mxu0
  %v1354 = vadd.f32 %v1173, %v1353
  %v1355 = vpop.f32.mrb[0].mxu0
  %1356 = vmatprep.mubr.f32.mxu0 0.0
  %1357 = vmatmul.mubr.f32.gmra.mrb[0].mxu0 %v1189
  %v1358 = vpop.f32.mrb[0].mxu0
  %v1359 = vadd.f32 %v1173, %v1358
  %v1360 = vpop.f32.mrb[0].mxu0
  %1361 = vmatprep.mubr.f32.mxu0 0.0
  %1362 = vmatmul.mubr.f32.gmra.mrb[0].mxu0 %v1192
  %v1363 = vpop.f32.mrb[0].mxu0
  %v1364 = vadd.f32 %v1173, %v1363
  %v1365 = vpop.f32.mrb[0].mxu0
  %1366 = vmatprep.mubr.f32.mxu0 0.0
  %1367 = vmatmul.mubr.f32.gmra.mrb[0].mxu0 %v1195
  %v1368 = vpop.f32.mrb[0].mxu0
  %v1369 = vadd.f32 %v1173, %v1368
  %v1370 = vpop.f32.mrb[0].mxu0
  %1371 = vmatprep.mubr.f32.mxu0 0.0
  %1372 = vmatmul.mubr.f32.gmra.mrb[0].mxu0 %v1198
  %v1373 = vpop.f32.mrb[0].mxu0
  %v1374 = vadd.f32 %v1173, %v1373
  %v1375 = vpop.f32.mrb[0].mxu0
  %1376 = vmatprep.mubr.f32.mxu0 0.0
  %1377 = vmatmul.mubr.f32.gmra.mrb[0].mxu0 %v1201
  %v1378 = vpop.f32.mrb[0].mxu0
  %v1379 = vadd.f32 %v1173, %v1378
  %v1380 = vpop.f32.mrb[0].mxu0
  %1381 = vmatprep.mubr.f32.mxu0 0.0
  %1382 = vmatmul.mubr.f32.gmra.mrb[0].mxu0 %v1204
  %v1383 = vpop.f32.mrb[0].mxu0
  %v1384 = vadd.f32 %v1173, %v1383
  %v1385 = vpop.f32.mrb[0].mxu0
  %1386 = vmatprep.mubr.f32.mxu0 0.0
  %1387 = vmatmul.mubr.f32.gmra.mrb[0].mxu0 %v1207
  %v1388 = vpop.f32.mrb[0].mxu0
  %v1389 = vadd.f32 %v1173, %v1388
  %v1390 = vpop.f32.mrb[0].mxu0
  %1391 = vmatprep.mubr.f32.mxu0 0.0
  %1392 = vmatmul.mubr.f32.gmra.mrb[0].mxu0 %v1210
  %v1393 = vpop.f32.mrb[0].mxu0
  %v1394 = vadd.f32 %v1173, %v1393
  %v1395 = vpop.f32.mrb[0].mxu0
  %1396 = vmatprep.mubr.f32.mxu0 0.0
  %1397 = vmatmul.mubr.f32.gmra.mrb[0].mxu0 %v1213
  %v1398 = vpop.f32.mrb[0].mxu0
  %v1399 = vadd.f32 %v1173, %v1398
  %v1400 = vpop.f32.mrb[0].mxu0
  %1401 = vmatprep.mubr.f32.mxu0 0.0
  %1402 = vmatmul.mubr.f32.gmra.mrb[0].mxu0 %v1216
  %v1403 = vpop.f32.mrb[0].mxu0
  %v1404 = vadd.f32 %v1173, %v1403
  %v1405 = vpop.f32.mrb[0].mxu0
  %1406 = vmatprep.mubr.f32.mxu0 0.0
  %1407 = vmatmul.mubr.f32.gmra.mrb[0].mxu0 %v1219
  %v1408 = vpop.f32.mrb[0].mxu0
  %v1409 = vadd.f32 %v1173, %v1408
  %v1410 = vpop.f32.mrb[0].mxu0
  %1411 = vmatprep.mubr.f32.mxu0 0.0
  %1412 = vmatmul.mubr.f32.gmra.mrb[0].mxu0 %v1222
  %v1413 = vpop.f32.mrb[0].mxu0
  %v1414 = vadd.f32 %v1173, %v1413
  %v1415 = vpop.f32.mrb[0].mxu0
  %1416 = vmatprep.mubr.f32.mxu0 0.0
  %1417 = vmatmul.mubr.f32.gmra.mrb[0].mxu0 %v1225
  %v1418 = vpop.f32.mrb[0].mxu0
  %v1419 = vadd.f32 %v1173, %v1418
  %v1420 = vpop.f32.mrb[0].mxu0
  %1421 = vmatprep.mubr.f32.mxu0 0.0
  %1422 = vmatmul.mubr.f32.gmra.mrb[0].mxu0 %v1228
  %v1423 = vpop.f32.mrb[0].mxu0
  %v1424 = vadd.f32 %v1173, %v1423
  %v1425 = vpop.f32.mrb[0].mxu0
  %1426 = vmatprep.mubr.f32.mxu0 0.0
  %1427 = vmatmul.mubr.f32.gmra.mrb[0].mxu0 %v1231
  %v1428 = vpop.f32.mrb[0].mxu0
  %v1429 = vadd.f32 %v1173, %v1428
  %v1430 = vpop.f32.mrb[0].mxu0
  %1431 = vmatprep.mubr.f32.mxu0 0.0
  %1432 = vmatmul.mubr.f32.gmra.mrb[0].mxu0 %v1234
  %v1433 = vpop.f32.mrb[0].mxu0
  %v1434 = vadd.f32 %v1173, %v1433
  %v1435 = vpop.f32.mrb[0].mxu0
  %1436 = vmatprep.mubr.f32.mxu0 0.0
  %1437 = vmatmul.mubr.f32.gmra.mrb[0].mxu0 %v1237
  %v1438 = vpop.f32.mrb[0].mxu0
  %v1439 = vadd.f32 %v1173, %v1438
  %v1440 = vpop.f32.mrb[0].mxu0
  %1441 = vmatprep.mubr.f32.mxu0 0.0
  %1442 = vmatmul.mubr.f32.gmra.mrb[0].mxu0 %v1240
  %v1443 = vpop.f32.mrb[0].mxu0
  %v1444 = vadd.f32 %v1173, %v1443
  %v1445 = vpop.f32.mrb[0].mxu0
  %1446 = vmatprep.mubr.f32.mxu0 0.0
  %1447 = vmatmul.mubr.f32.gmra.mrb[0].mxu0 %v1243
  %v1448 = vpop.f32.mrb[0].mxu0
  %v1449 = vadd.f32 %v1173, %v1448
  %v1450 = vpop.f32.mrb[0].mxu0
  %1451 = vmatprep.mubr.f32.mxu0 0.0
  %1452 = vmatmul.mubr.f32.gmra.mrb[0].mxu0 %v1246
  %v1453 = vpop.f32.mrb[0].mxu0
  %v1454 = vadd.f32 %v1173, %v1453
  %v1455 = vpop.f32.mrb[0].mxu0
  %1456 = vmatprep.mubr.f32.mxu0 0.0
  %1457 = vmatmul.mubr.f32.gmra.mrb[0].mxu0 %v1249
  %v1458 = vpop.f32.mrb[0].mxu0
  %v1459 = vadd.f32 %v1173, %v1458
  %v1460 = vpop.f32.mrb[0].mxu0
  %1461 = vmatprep.mubr.f32.mxu0 0.0
  %1462 = vmatmul.mubr.f32.gmra.mrb[0].mxu0 %v1252
  %v1463 = vpop.f32.mrb[0].mxu0
  %v1464 = vadd.f32 %v1173, %v1463
  %v1465 = vpop.f32.mrb[0].mxu0
  %1466 = vmatprep.mubr.f32.mxu0 0.0
  %1467 = vmatmul.mubr.f32.gmra.mrb[0].mxu0 %v1255
  %v1468 = vpop.f32.mrb[0].mxu0
  %v1469 = vadd.f32 %v1173, %v1468
  %v1470 = vpop.f32.mrb[0].mxu0
  %1471 = vmatprep.mubr.f32.mxu0 0.0
  %1472 = vmatmul.mubr.f32.gmra.mrb[0].mxu0 %v1258
  %v1473 = vpop.f32.mrb[0].mxu0
  %v1474 = vadd.f32 %v1173, %v1473
  %v1475 = vpop.f32.mrb[0].mxu0
  %1476 = vmatprep.mubr.f32.mxu0 0.0
  %1477 = vmatmul.mubr.f32.gmra.mrb[0].mxu0 %v1261
  %v1478 = vpop.f32.mrb[0].mxu0
  %v1479 = vadd.f32 %v1173, %v1478
  %v1480 = vpop.f32.mrb[0].mxu0
  %1481 = vmatprep.mubr.f32.mxu0 0.0
  %1482 = vmatmul.mubr.f32.gmra.mrb[0].mxu0 %v1264
  %v1483 = vpop.f32.mrb[0].mxu0
  %v1484 = vadd.f32 %v1173, %v1483
  %v1485 = vpop.f32.mrb[0].mxu0
  %1486 = vmatprep.mubr.f32.mxu0 0.0
  %1487 = vmatmul.mubr.f32.gmra.mrb[0].mxu0 %v1267
  %v1488 = vpop.f32.mrb[0].mxu0
  %v1489 = vadd.f32 %v1173, %v1488
  %v1490 = vpop.f32.mrb[0].mxu0
  %1491 = vmatprep.mubr.f32.mxu0 0.0
  %1492 = vmatmul.mubr.f32.gmra.mrb[0].mxu0 %v1270
  %v1493 = vpop.f32.mrb[0].mxu0
  %v1494 = vadd.f32 %v1173, %v1493
  %v1495 = vpop.f32.mrb[0].mxu0
  %1496 = vdwg.mxu0
  %vm1497 = vcmask 64512
  %1498 = vst.msk [vmem:[%s9] sm:$0xff] %vm1497, %v1339
  %1499 = vst.msk [vmem:[%s9 + $0x8] sm:$0xff] %vm1497, %v1344
  %1500 = vst.msk [vmem:[%s9 + $0x10] sm:$0xff] %vm1497, %v1349
  %1501 = vst.msk [vmem:[%s9 + $0x18] sm:$0xff] %vm1497, %v1354
  %1502 = vst.msk [vmem:[%s9 + $0x20] sm:$0xff] %vm1497, %v1359
  %1503 = vst.msk [vmem:[%s9 + $0x28] sm:$0xff] %vm1497, %v1364
  %1504 = vst.msk [vmem:[%s9 + $0x30] sm:$0xff] %vm1497, %v1369
  %1505 = vst.msk [vmem:[%s9 + $0x38] sm:$0xff] %vm1497, %v1374
  %1506 = vst.msk [vmem:[%s9 + $0x40] sm:$0xff] %vm1497, %v1379
  %1507 = vst.msk [vmem:[%s9 + $0x48] sm:$0xff] %vm1497, %v1384
  %1508 = vst.msk [vmem:[%s9 + $0x50] sm:$0xff] %vm1497, %v1389
  %1509 = vst.msk [vmem:[%s9 + $0x58] sm:$0xff] %vm1497, %v1394
  %1510 = vst.msk [vmem:[%s9 + $0x60] sm:$0xff] %vm1497, %v1399
  %1511 = vst.msk [vmem:[%s9 + $0x68] sm:$0xff] %vm1497, %v1404
  %1512 = vst.msk [vmem:[%s9 + $0x70] sm:$0xff] %vm1497, %v1409
  %1513 = vst.msk [vmem:[%s9 + $0x78] sm:$0xff] %vm1497, %v1414
  %1514 = vst.msk [vmem:[%s9 + $0x80] sm:$0xff] %vm1497, %v1419
  %1515 = vst.msk [vmem:[%s9 + $0x88] sm:$0xff] %vm1497, %v1424
  %1516 = vst.msk [vmem:[%s9 + $0x90] sm:$0xff] %vm1497, %v1429
  %1517 = vst.msk [vmem:[%s9 + $0x98] sm:$0xff] %vm1497, %v1434
  %1518 = vst.msk [vmem:[%s9 + $0xa0] sm:$0xff] %vm1497, %v1439
  %1519 = vst.msk [vmem:[%s9 + $0xa8] sm:$0xff] %vm1497, %v1444
  %1520 = vst.msk [vmem:[%s9 + $0xb0] sm:$0xff] %vm1497, %v1449
  %1521 = vst.msk [vmem:[%s9 + $0xb8] sm:$0xff] %vm1497, %v1454
  %1522 = vst.msk [vmem:[%s9 + $0xc0] sm:$0xff] %vm1497, %v1459
  %1523 = vst.msk [vmem:[%s9 + $0xc8] sm:$0xff] %vm1497, %v1464
  %1524 = vst.msk [vmem:[%s9 + $0xd0] sm:$0xff] %vm1497, %v1469
  %1525 = vst.msk [vmem:[%s9 + $0xd8] sm:$0xff] %vm1497, %v1474
  %1526 = vst.msk [vmem:[%s9 + $0xe0] sm:$0xff] %vm1497, %v1479
  %1527 = vst.msk [vmem:[%s9 + $0xe8] sm:$0xff] %vm1497, %v1484
  %1528 = vst.msk [vmem:[%s9 + $0xf0] sm:$0xff] %vm1497, %v1489
  %1529 = vst.msk [vmem:[%s9 + $0xf8] sm:$0xff] %vm1497, %v1494
  // Predicated region
  $region38: #{nn_forward.1} parent=0 // pred_check
    _
  $region39: #{nn_forward.1} parent=0 // pred_check_branch
    %1531 = sbr.rel (0) target = $region41
  $region40: #{nn_forward.1} parent=0 // pred_region
    _
  $region41: #{nn_forward.1} parent=0 // pred_fallthru
    _
  // Predicated region
  $region42: #{nn_forward.1} parent=0 // pred_check
    _
  $region43: #{nn_forward.1} parent=0 // pred_check_branch
    %1533 = sbr.rel (0) target = $region45
  $region44: #{nn_forward.1} parent=0 // pred_region
    _
  $region45: #{nn_forward.1} parent=0 // pred_fallthru
    _

</llo_original>
